<compile_context>
chip_gen: v7x
topology: tpu7x:2x2x1
jax: 0.10.0
libtpu: 0.0.40
codegen_flags: <defaults>
</compile_context>

<pallas_src>
import functools

import jax
import jax.numpy as jnp
from jax.experimental import pallas as pl
from jax.experimental.pallas import tpu as pltpu

_LANE = 128


def _round_up(v, m):
    return (v + m - 1) // m * m


def _cdiv(a, b):
    return (a + b - 1) // b


def _pad2(a, rows, cols):
    return jnp.pad(a, ((0, rows - a.shape[0]), (0, cols - a.shape[1])))


# --------------------------------------------------------------------------- kernel
def _gnn_kernel(adj_ref, x_ref, w_ref, b_ref, out_ref, *, ci_p, hid_p, n_p, bt):
    f32 = jnp.float32
    adj = adj_ref[...]                       # (bt, n_p, n_p)   matmul dtype
    x3 = x_ref[...]                          # (bt, n_p, ci_p)  matmul dtype
    dt = x3.dtype
    rows = bt * n_p

    # static views into the packed weight/bias slabs (zero-cost slices)
    o = 0
    wrel1 = w_ref[o:o + ci_p, :];  o += ci_p
    wroot1 = w_ref[o:o + ci_p, :]; o += ci_p
    wrel2 = w_ref[o:o + hid_p, :]; o += hid_p
    wroot2 = w_ref[o:o + hid_p, :]; o += hid_p
    wc1 = w_ref[o:o + hid_p, :];   o += hid_p
    wc2 = w_ref[o:o + hid_p, :];   o += hid_p
    wc3 = w_ref[o:o + hid_p, :]
    b1, b2 = b_ref[0:1, :], b_ref[1:2, :]
    bc1, bc2, bc3 = b_ref[2:3, :], b_ref[3:4, :], b_ref[4:5, :]

    x_flat = x3.reshape(rows, ci_p)

    # ---- GraphConv layer 1: relu( (A@x)@Wrel1 + x@Wroot1 + b1 ) -------------
    agg = jnp.einsum("bij,bjc->bic", adj, x3,
                     preferred_element_type=f32).reshape(rows, ci_p).astype(dt)
    h = (jnp.dot(agg, wrel1, preferred_element_type=f32)
         + jnp.dot(x_flat, wroot1, preferred_element_type=f32) + b1)
    x1 = jnp.maximum(h, 0.0).astype(dt)              # (rows, hid_p)
    # dropout (training=False) -> identity

    # ---- GraphConv layer 2 ----------------------------------------------------
    agg = jnp.einsum("bij,bjc->bic", adj, x1.reshape(bt, n_p, hid_p),
                     preferred_element_type=f32).reshape(rows, hid_p).astype(dt)
    h = (jnp.dot(agg, wrel2, preferred_element_type=f32)
         + jnp.dot(x1, wroot2, preferred_element_type=f32) + b2)
    x2 = jnp.maximum(h, 0.0).astype(dt)

    # ---- 3-layer MLP classifier ------------------------------------------------
    h = jnp.maximum(jnp.dot(x2, wc1, preferred_element_type=f32) + bc1, 0.0).astype(dt)
    h = jnp.maximum(jnp.dot(h, wc2, preferred_element_type=f32) + bc2, 0.0).astype(dt)
    logits = jnp.dot(h, wc3, preferred_element_type=f32) + bc3      # (rows, hid_p) f32
    # bc3 padded lanes carry -1e30 -> plain log_softmax, padded lanes exp to 0.

    m = jnp.max(logits, axis=-1, keepdims=True)
    lse = m + jnp.log(jnp.sum(jnp.exp(logits - m), axis=-1, keepdims=True))
    out_ref[...] = (logits - lse).reshape(bt, n_p, hid_p).astype(out_ref.dtype)


# --------------------------------------------------------------- packing helpers
def pack_params(params, out_channels, matmul_dtype):
    """Pack the 12 small weight/bias tensors into one weight slab + one bias slab."""
    ci_p = _round_up(params["wrel1"].shape[0], _LANE)
    hid = params["wrel1"].shape[1]
    P = max(_round_up(hid, _LANE), _round_up(out_channels, _LANE))
    wslab = jnp.concatenate(
        [_pad2(params["wrel1"], ci_p, P), _pad2(params["wroot1"], ci_p, P),
         _pad2(params["wrel2"], P, P), _pad2(params["wroot2"], P, P),
         _pad2(params["wc1"], P, P), _pad2(params["wc2"], P, P),
         _pad2(params["wc3"], P, P)], axis=0).astype(matmul_dtype)
    # Pre-bake the class mask: padded lanes of bc3 get -1e30.
    bc3 = jnp.full((1, P), -1e30, jnp.float32).at[:, :out_channels].set(params["bc3"])
    bslab = jnp.concatenate(
        [_pad2(params["brel1"], 1, P), _pad2(params["brel2"], 1, P),
         _pad2(params["bc1"], 1, P), _pad2(params["bc2"], 1, P), bc3,
         jnp.zeros((3, P), jnp.float32)], axis=0)                    # (8, P) f32
    return wslab, bslab, ci_p, P


def _choose_packing(B, N, tiles_per_step_cap):
    """graphs-per-tile (block-diag packing), tiles-per-grid-step, padded node dim."""
    if N <= _LANE:
        n_p = _LANE
        gpt = max(1, _LANE // N)
    else:
        n_p = _round_up(N, _LANE)
        gpt = 1
    # Keep the "parallel" grid axis length >= 2 when possible (v7x: 2 TensorCores).
    gpt = max(1, min(gpt, B // 2 if B >= 2 else 1))
    nt = _cdiv(B, gpt)
    bt = max(1, min(tiles_per_step_cap, nt // 2))
    NT = _cdiv(nt, bt) * bt
    return gpt, bt, n_p, NT


def pack_graphs(adj, x, gpt, bt, n_p, ci_p, matmul_dtype):
    """Block-diagonally pack `gpt` graphs per (n_p, n_p) adjacency tile; stack features."""
    B, N, C = x.shape
    NT = _cdiv(_cdiv(B, gpt), bt) * bt
    Bp = NT * gpt
    adj = jnp.pad(adj, ((0, Bp - B), (0, 0), (0, 0)))
    x = jnp.pad(x, ((0, Bp - B), (0, 0), (0, 0)))
    eye = jnp.eye(gpt, dtype=adj.dtype)
    blk = jnp.einsum("tgij,gh->tgihj", adj.reshape(NT, gpt, N, N),
                     eye).reshape(NT, gpt * N, gpt * N)
    adj_p = jnp.pad(blk, ((0, 0), (0, n_p - gpt * N),
                          (0, n_p - gpt * N))).astype(matmul_dtype)
    x_p = jnp.pad(x.reshape(NT, gpt * N, C),
                  ((0, 0), (0, n_p - gpt * N), (0, ci_p - C))).astype(matmul_dtype)
    return adj_p, x_p


# --------------------------------------------------------------------- pallas call
def _gnn_pallas(adj_p, x_p, wslab, bslab, *, ci_p, P, n_p, bt):
    NT = adj_p.shape[0]
    grid_len = NT // bt
    wrows = wslab.shape[0]
    flops_tile = 2 * n_p * n_p * (ci_p + P) + 4 * n_p * ci_p * P + 10 * n_p * P * P
    cost = pl.CostEstimate(
        flops=NT * flops_tile,
        transcendentals=NT * n_p * (P + 1),
        bytes_accessed=(adj_p.size * adj_p.dtype.itemsize
                        + x_p.size * x_p.dtype.itemsize
                        + NT * n_p * P * 4
                        + wslab.size * wslab.dtype.itemsize
                        + bslab.size * 4))
    kernel = functools.partial(_gnn_kernel, ci_p=ci_p, hid_p=P, n_p=n_p, bt=bt)
    return pl.pallas_call(
        kernel,
        out_shape=jax.ShapeDtypeStruct((NT, n_p, P), jnp.float32),
        grid=(grid_len,),
        in_specs=[
            pl.BlockSpec((bt, n_p, n_p), lambda g: (g, 0, 0)),   # packed adjacency tiles
            pl.BlockSpec((bt, n_p, ci_p), lambda g: (g, 0, 0)),  # packed node features
            pl.BlockSpec((wrows, P), lambda g: (0, 0)),          # resident weight slab
            pl.BlockSpec((8, P), lambda g: (0, 0)),              # resident bias slab
        ],
        out_specs=pl.BlockSpec((bt, n_p, P), lambda g: (g, 0, 0)),
        compiler_params=pltpu.CompilerParams(
            dimension_semantics=("parallel",),
            vmem_limit_bytes=32 * 1024 * 1024,
        ),
        cost_estimate=cost,
    )(adj_p, x_p, wslab, bslab)


@functools.partial(jax.jit,
                   static_argnames=("out_channels", "matmul_dtype", "tiles_per_step_cap"))
def gnn_forward(adj, x, params, out_channels,
                matmul_dtype=jnp.bfloat16, tiles_per_step_cap=4):
    """adj: (B, N, N) dense adjacency with adj[dst, src] = #edges; x: (B, N, C_in)."""
    B, N, _ = x.shape
    wslab, bslab, ci_p, P = pack_params(params, out_channels, matmul_dtype)
    gpt, bt, n_p, NT = _choose_packing(B, N, tiles_per_step_cap)
    # In production, pack_params / pack_graphs would be hoisted out of the per-call path.
    adj_p, x_p = pack_graphs(adj, x, gpt, bt, n_p, ci_p, matmul_dtype)
    out_p = _gnn_pallas(adj_p, x_p, wslab, bslab, ci_p=ci_p, P=P, n_p=n_p, bt=bt)
    out = out_p[:, :gpt * N, :out_channels].reshape(NT * gpt, N, out_channels)
    return out[:B]


# ---------------- pure-JAX reference (matches the torch module, eval mode) ----------------
def _gnn_ref_single(adj, x, p):
    h = x
    for wrel, brel, wroot in ((p["wrel1"], p["brel1"], p["wroot1"]),
                              (p["wrel2"], p["brel2"], p["wroot2"])):
        h = jnp.maximum((adj @ h) @ wrel + brel + h @ wroot, 0.0)
    h = jnp.maximum(h @ p["wc1"] + p["bc1"], 0.0)
    h = jnp.maximum(h @ p["wc2"] + p["bc2"], 0.0)
    logits = h @ p["wc3"] + p["bc3"]
    return jax.nn.log_softmax(logits, axis=-1)


def _init_linear(key, fan_in, fan_out):
    kw, kb = jax.random.split(key)
    bound = 1.0 / jnp.sqrt(float(fan_in))
    w = jax.random.uniform(kw, (fan_in, fan_out), jnp.float32, -bound, bound)
    b = jax.random.uniform(kb, (1, fan_out), jnp.float32, -bound, bound)
    return w, b


if __name__ == "__main__":
    B = 8                      # graphs per call (block-diag packed into 128x128 tiles)
    N = 16                     # nodes per graph
    in_channels = 8
    hidden_channels = 32
    out_channels = 4

    key = jax.random.PRNGKey(0)
    keys = jax.random.split(key, 10)

    # Node features.
    x = jax.random.normal(keys[0], (B, N, in_channels), jnp.float32)

    # Deterministic random edge lists -> dense adjacency adj[dst, src] += 1,
    # so GraphConv 'add' aggregation becomes adj @ x inside the kernel.
    E = 3 * N
    src = jax.random.randint(jax.random.fold_in(keys[1], 0), (B, E), 0, N)
    dst = jax.random.randint(jax.random.fold_in(keys[1], 1), (B, E), 0, N)
    adj = jax.vmap(lambda s, d: jnp.zeros((N, N), jnp.float32).at[d, s].add(1.0))(src, dst)

    # Parameters (GraphConv = lin_rel (bias) + lin_root (no bias)); W is (in, out).
    wrel1, brel1 = _init_linear(keys[2], in_channels, hidden_channels)
    wroot1, _ = _init_linear(keys[3], in_channels, hidden_channels)
    wrel2, brel2 = _init_linear(keys[4], hidden_channels, hidden_channels)
    wroot2, _ = _init_linear(keys[5], hidden_channels, hidden_channels)
    wc1, bc1 = _init_linear(keys[6], hidden_channels, hidden_channels)
    wc2, bc2 = _init_linear(keys[7], hidden_channels, hidden_channels)
    wc3, bc3 = _init_linear(keys[8], hidden_channels, out_channels)
    params = dict(wrel1=wrel1, brel1=brel1, wroot1=wroot1,
                  wrel2=wrel2, brel2=brel2, wroot2=wroot2,
                  wc1=wc1, bc1=bc1, wc2=wc2, bc2=bc2, wc3=wc3, bc3=bc3)

    ref = jax.vmap(lambda a, xx: _gnn_ref_single(a, xx, params))(adj, x)

    # f32 matmul path: bit-tight check against the reference.
    out32 = gnn_forward(adj, x, params, out_channels=out_channels,
                        matmul_dtype=jnp.float32)
    jax.block_until_ready(out32)
    assert out32.shape == (B, N, out_channels)
    assert bool(jnp.all(jnp.abs(out32 - ref) < 1e-4))
    assert bool(jnp.all(jnp.abs(jnp.sum(jnp.exp(out32), axis=-1) - 1.0) < 1e-4))

    # bf16 matmul default (MXU-native on v5e/v6e/v7x): looser tolerance vs f32 reference.
    out16 = gnn_forward(adj, x, params, out_channels=out_channels)
    jax.block_until_ready(out16)
    assert out16.shape == (B, N, out_channels)
    assert bool(jnp.all(jnp.abs(out16 - ref) <= 5e-2 + 5e-2 * jnp.abs(ref)))
    assert bool(jnp.all(jnp.abs(jnp.sum(jnp.exp(out16), axis=-1) - 1.0) < 1e-3))

    print("KERNEL_OK")
</pallas_src>

<mosaic_0001>
module attributes {stable_mosaic.version = 11 : i64} {
  func.func @_gnn_kernel(%arg0: i32, %arg1: memref<1x128x128xf32, #tpu.memory_space<vmem>>, %arg2: memref<1x128x128xf32, #tpu.memory_space<vmem>>, %arg3: memref<896x128xf32, #tpu.memory_space<vmem>>, %arg4: memref<8x128xf32, #tpu.memory_space<vmem>>, %arg5: memref<1x128x128xf32, #tpu.memory_space<vmem>>) attributes {dimension_semantics = [#tpu.dimension_semantics<parallel>], iteration_bounds = array<i64: 2>, scalar_prefetch = 0 : i64, scratch_operands = 0 : i64, tpu.core_type = #tpu.core_type<tc>, window_params = [{transform_indices = @transform_0, window_bounds = array<i64: 1, 128, 128>}, {transform_indices = @transform_1, window_bounds = array<i64: 1, 128, 128>}, {pipeline_mode = #tpu.pipeline_mode<synchronous>, transform_indices = @transform_2, window_bounds = array<i64: 896, 128>}, {pipeline_mode = #tpu.pipeline_mode<synchronous>, transform_indices = @transform_3, window_bounds = array<i64: 8, 128>}, {transform_indices = @transform_4, window_bounds = array<i64: 1, 128, 128>}]} {
    %c0 = arith.constant 0 : index
    %c0_0 = arith.constant 0 : index
    %c0_1 = arith.constant 0 : index
    %0 = vector.load %arg1[%c0, %c0_0, %c0_1] : memref<1x128x128xf32, #tpu.memory_space<vmem>>, vector<1x128x128xf32>
    %c0_2 = arith.constant 0 : index
    %c0_3 = arith.constant 0 : index
    %c0_4 = arith.constant 0 : index
    %1 = vector.load %arg2[%c0_2, %c0_3, %c0_4] : memref<1x128x128xf32, #tpu.memory_space<vmem>>, vector<1x128x128xf32>
    %c0_5 = arith.constant 0 : index
    %c0_6 = arith.constant 0 : index
    %2 = vector.load %arg3[%c0_5, %c0_6] : memref<896x128xf32, #tpu.memory_space<vmem>>, vector<128x128xf32>
    %c128 = arith.constant 128 : index
    %c0_7 = arith.constant 0 : index
    %3 = vector.load %arg3[%c128, %c0_7] : memref<896x128xf32, #tpu.memory_space<vmem>>, vector<128x128xf32>
    %c256 = arith.constant 256 : index
    %c0_8 = arith.constant 0 : index
    %4 = vector.load %arg3[%c256, %c0_8] : memref<896x128xf32, #tpu.memory_space<vmem>>, vector<128x128xf32>
    %c384 = arith.constant 384 : index
    %c0_9 = arith.constant 0 : index
    %5 = vector.load %arg3[%c384, %c0_9] : memref<896x128xf32, #tpu.memory_space<vmem>>, vector<128x128xf32>
    %c512 = arith.constant 512 : index
    %c0_10 = arith.constant 0 : index
    %6 = vector.load %arg3[%c512, %c0_10] : memref<896x128xf32, #tpu.memory_space<vmem>>, vector<128x128xf32>
    %c640 = arith.constant 640 : index
    %c0_11 = arith.constant 0 : index
    %7 = vector.load %arg3[%c640, %c0_11] : memref<896x128xf32, #tpu.memory_space<vmem>>, vector<128x128xf32>
    %c768 = arith.constant 768 : index
    %c0_12 = arith.constant 0 : index
    %8 = vector.load %arg3[%c768, %c0_12] : memref<896x128xf32, #tpu.memory_space<vmem>>, vector<128x128xf32>
    %c0_13 = arith.constant 0 : index
    %c0_14 = arith.constant 0 : index
    %9 = vector.load %arg4[%c0_13, %c0_14] : memref<8x128xf32, #tpu.memory_space<vmem>>, vector<1x128xf32>
    %c1 = arith.constant 1 : index
    %c0_15 = arith.constant 0 : index
    %10 = vector.load %arg4[%c1, %c0_15] : memref<8x128xf32, #tpu.memory_space<vmem>>, vector<1x128xf32>
    %c2 = arith.constant 2 : index
    %c0_16 = arith.constant 0 : index
    %11 = vector.load %arg4[%c2, %c0_16] : memref<8x128xf32, #tpu.memory_space<vmem>>, vector<1x128xf32>
    %c3 = arith.constant 3 : index
    %c0_17 = arith.constant 0 : index
    %12 = vector.load %arg4[%c3, %c0_17] : memref<8x128xf32, #tpu.memory_space<vmem>>, vector<1x128xf32>
    %c4 = arith.constant 4 : index
    %c0_18 = arith.constant 0 : index
    %13 = vector.load %arg4[%c4, %c0_18] : memref<8x128xf32, #tpu.memory_space<vmem>>, vector<1x128xf32>
    %14 = vector.shape_cast %1 : vector<1x128x128xf32> to vector<128x128xf32>
    "tpu.trace_start"() <{level = 10 : i32, message = "bij,bjc->bic"}> : () -> ()
    %cst = arith.constant dense<0.000000e+00> : vector<1x128x128xf32>
    %15 = tpu.matmul %0, %1, %cst {dimension_numbers = #tpu.dot_dimension_numbers<[2], [1], [1], [2], [0, 0, 0, 1, 1, 2], [0], [0]>} : vector<1x128x128xf32>, vector<1x128x128xf32>, vector<1x128x128xf32> -> vector<1x128x128xf32>
    "tpu.trace_stop"() : () -> ()
    %16 = vector.shape_cast %15 : vector<1x128x128xf32> to vector<128x128xf32>
    %cst_19 = arith.constant dense<0.000000e+00> : vector<128x128xf32>
    %17 = tpu.matmul %16, %2, %cst_19 {dimension_numbers = #tpu.dot_dimension_numbers<[1], [0], [0], [1], [0, 0, 1, 1], [], []>} : vector<128x128xf32>, vector<128x128xf32>, vector<128x128xf32> -> vector<128x128xf32>
    %cst_20 = arith.constant dense<0.000000e+00> : vector<128x128xf32>
    %18 = tpu.matmul %14, %3, %cst_20 {dimension_numbers = #tpu.dot_dimension_numbers<[1], [0], [0], [1], [0, 0, 1, 1], [], []>} : vector<128x128xf32>, vector<128x128xf32>, vector<128x128xf32> -> vector<128x128xf32>
    %19 = arith.addf %17, %18 : vector<128x128xf32>
    %20 = vector.broadcast %9 : vector<1x128xf32> to vector<128x128xf32>
    %21 = arith.addf %19, %20 : vector<128x128xf32>
    %cst_21 = arith.constant 0.000000e+00 : f32
    %22 = vector.broadcast %cst_21 : f32 to vector<128x128xf32>
    %23 = arith.maximumf %21, %22 : vector<128x128xf32>
    %24 = vector.shape_cast %23 : vector<128x128xf32> to vector<1x128x128xf32>
    "tpu.trace_start"() <{level = 10 : i32, message = "bij,bjc->bic"}> : () -> ()
    %cst_22 = arith.constant dense<0.000000e+00> : vector<1x128x128xf32>
    %25 = tpu.matmul %0, %24, %cst_22 {dimension_numbers = #tpu.dot_dimension_numbers<[2], [1], [1], [2], [0, 0, 0, 1, 1, 2], [0], [0]>} : vector<1x128x128xf32>, vector<1x128x128xf32>, vector<1x128x128xf32> -> vector<1x128x128xf32>
    "tpu.trace_stop"() : () -> ()
    %26 = vector.shape_cast %25 : vector<1x128x128xf32> to vector<128x128xf32>
    %cst_23 = arith.constant dense<0.000000e+00> : vector<128x128xf32>
    %27 = tpu.matmul %26, %4, %cst_23 {dimension_numbers = #tpu.dot_dimension_numbers<[1], [0], [0], [1], [0, 0, 1, 1], [], []>} : vector<128x128xf32>, vector<128x128xf32>, vector<128x128xf32> -> vector<128x128xf32>
    %cst_24 = arith.constant dense<0.000000e+00> : vector<128x128xf32>
    %28 = tpu.matmul %23, %5, %cst_24 {dimension_numbers = #tpu.dot_dimension_numbers<[1], [0], [0], [1], [0, 0, 1, 1], [], []>} : vector<128x128xf32>, vector<128x128xf32>, vector<128x128xf32> -> vector<128x128xf32>
    %29 = arith.addf %27, %28 : vector<128x128xf32>
    %30 = vector.broadcast %10 : vector<1x128xf32> to vector<128x128xf32>
    %31 = arith.addf %29, %30 : vector<128x128xf32>
    %cst_25 = arith.constant 0.000000e+00 : f32
    %32 = vector.broadcast %cst_25 : f32 to vector<128x128xf32>
    %33 = arith.maximumf %31, %32 : vector<128x128xf32>
    %cst_26 = arith.constant dense<0.000000e+00> : vector<128x128xf32>
    %34 = tpu.matmul %33, %6, %cst_26 {dimension_numbers = #tpu.dot_dimension_numbers<[1], [0], [0], [1], [0, 0, 1, 1], [], []>} : vector<128x128xf32>, vector<128x128xf32>, vector<128x128xf32> -> vector<128x128xf32>
    %35 = vector.broadcast %11 : vector<1x128xf32> to vector<128x128xf32>
    %36 = arith.addf %34, %35 : vector<128x128xf32>
    %cst_27 = arith.constant 0.000000e+00 : f32
    %37 = vector.broadcast %cst_27 : f32 to vector<128x128xf32>
    %38 = arith.maximumf %36, %37 : vector<128x128xf32>
    %cst_28 = arith.constant dense<0.000000e+00> : vector<128x128xf32>
    %39 = tpu.matmul %38, %7, %cst_28 {dimension_numbers = #tpu.dot_dimension_numbers<[1], [0], [0], [1], [0, 0, 1, 1], [], []>} : vector<128x128xf32>, vector<128x128xf32>, vector<128x128xf32> -> vector<128x128xf32>
    %40 = vector.broadcast %12 : vector<1x128xf32> to vector<128x128xf32>
    %41 = arith.addf %39, %40 : vector<128x128xf32>
    %cst_29 = arith.constant 0.000000e+00 : f32
    %42 = vector.broadcast %cst_29 : f32 to vector<128x128xf32>
    %43 = arith.maximumf %41, %42 : vector<128x128xf32>
    %cst_30 = arith.constant dense<0.000000e+00> : vector<128x128xf32>
    %44 = tpu.matmul %43, %8, %cst_30 {dimension_numbers = #tpu.dot_dimension_numbers<[1], [0], [0], [1], [0, 0, 1, 1], [], []>} : vector<128x128xf32>, vector<128x128xf32>, vector<128x128xf32> -> vector<128x128xf32>
    %45 = vector.broadcast %13 : vector<1x128xf32> to vector<128x128xf32>
    %46 = arith.addf %44, %45 : vector<128x128xf32>
    %cst_31 = arith.constant dense<0xFF800000> : vector<128xf32>
    %47 = vector.multi_reduction <maximumf>, %46, %cst_31 [1] : vector<128x128xf32> to vector<128xf32>
    %48 = vector.shape_cast %47 : vector<128xf32> to vector<128x1xf32>
    %49 = vector.broadcast %48 : vector<128x1xf32> to vector<128x128xf32>
    %50 = arith.subf %46, %49 : vector<128x128xf32>
    %51 = math.exp %50 : vector<128x128xf32>
    %cst_32 = arith.constant dense<0.000000e+00> : vector<128xf32>
    %52 = vector.multi_reduction <add>, %51, %cst_32 [1] : vector<128x128xf32> to vector<128xf32>
    %53 = vector.shape_cast %52 : vector<128xf32> to vector<128x1xf32>
    %54 = math.log %53 : vector<128x1xf32>
    %55 = arith.addf %48, %54 : vector<128x1xf32>
    %56 = vector.broadcast %55 : vector<128x1xf32> to vector<128x128xf32>
    %57 = arith.subf %46, %56 : vector<128x128xf32>
    %58 = vector.shape_cast %57 : vector<128x128xf32> to vector<1x128x128xf32>
    %c0_33 = arith.constant 0 : index
    %c0_34 = arith.constant 0 : index
    %c0_35 = arith.constant 0 : index
    %59 = vector.load %arg5[%c0_33, %c0_34, %c0_35] : memref<1x128x128xf32, #tpu.memory_space<vmem>>, vector<1x128x128xf32>
    tpu.vector_store %arg5[%c0_33, %c0_34, %c0_35], %58 {strides = array<i32>} : memref<1x128x128xf32, #tpu.memory_space<vmem>>, vector<1x128x128xf32>,
    return
  }
  func.func @transform_0(%arg0: i32) -> (i32, i32, i32) {
    %c0_i32 = arith.constant 0 : i32
    %c0_i32_0 = arith.constant 0 : i32
    %c0_i32_1 = arith.constant 0 : i32
    return %arg0, %c0_i32, %c0_i32_0 : i32, i32, i32
  }
  func.func @transform_1(%arg0: i32) -> (i32, i32, i32) {
    %c0_i32 = arith.constant 0 : i32
    %c0_i32_0 = arith.constant 0 : i32
    %c0_i32_1 = arith.constant 0 : i32
    return %arg0, %c0_i32, %c0_i32_0 : i32, i32, i32
  }
  func.func @transform_2(%arg0: i32) -> (i32, i32) {
    %c0_i32 = arith.constant 0 : i32
    %c0_i32_0 = arith.constant 0 : i32
    %c0_i32_1 = arith.constant 0 : i32
    return %c0_i32, %c0_i32_0 : i32, i32
  }
  func.func @transform_3(%arg0: i32) -> (i32, i32) {
    %c0_i32 = arith.constant 0 : i32
    %c0_i32_0 = arith.constant 0 : i32
    %c0_i32_1 = arith.constant 0 : i32
    return %c0_i32, %c0_i32_0 : i32, i32
  }
  func.func @transform_4(%arg0: i32) -> (i32, i32, i32) {
    %c0_i32 = arith.constant 0 : i32
    %c0_i32_0 = arith.constant 0 : i32
    %c0_i32_1 = arith.constant 0 : i32
    return %arg0, %c0_i32, %c0_i32_0 : i32, i32, i32
  }
}

</mosaic_0001>

<llo_original>
// kernel: gnn_forward.1
$region0: #{gnn_forward.1}
  #allocation0 [shape = 'u32[]', space=smem, size = 0x4, offset = 0x4, fixed_abs, tag = 'smem constant byte address 0x4 - core index']
  #allocation1 [shape = 'u32[144,128]{1,0:T(1,128)}', space=vmem, size = 0x12000, scoped, tag = 'internal scratch']
  %s0 = inlined_call_operand.vmem [shape: f32[2,128,128], index: 0, kind: input, shape index: {}]
  %s1 = inlined_call_operand.vmem [shape: f32[2,128,128], index: 1, kind: input, shape index: {}]
  %s2 = inlined_call_operand.vmem [shape: f32[896,128], index: 2, kind: input, shape index: {}]
  %s3 = inlined_call_operand.vmem [shape: f32[8,128], index: 3, kind: input, shape index: {}]
  %s4 = inlined_call_operand.vmem [shape: f32[2,128,128], index: 4, kind: output, shape index: {}]
  %s5 = sld [smem:[#allocation0]]
  $region49: #{gnn_forward.1} parent=0
    _
  %s7 = ssub.s32 1, %s5
  %s8 = scalar_select 0, %s7, %s5
  loop: start=0, step=1, limit=4
  $region2: #{gnn_forward.1} parent=0 // loop_pre_header
    _
  $region3: #{gnn_forward.1} parent=0 // loop_header
    %s10 = sphi 0, %s14
    %p11 = scmp.ge.s32.totalorder %s10, 4
    %s20 = sphi 0, %s22
    %s23 = sphi 0, %s20
    %s24 = sphi 0, %s23
    %s40 = sphi 0, %s24
    %s46 = sphi 0, %s48
    %s49 = sphi 0, %s46
    %s50 = sphi 0, %s49
    %s66 = sphi 0, %s50
    %s70 = sphi 0, %s70
    %s72 = sphi 0, %s70
    %s73 = sphi 0, %s72
    %s87 = sphi 0, %s73
    %s91 = sphi 0, %s91
    %s93 = sphi 0, %s91
    %s94 = sphi 0, %s93
    %s108 = sphi 0, %s94
    %s114 = sphi 0, %s116
    %s117 = sphi 0, %s114
    %s118 = sphi 0, %s117
    %s134 = sphi 0, %s118
  $region4: #{gnn_forward.1} parent=0 // loop_header_branch
    %13 = sbr.rel (%p11) target = $region8
  $region5: #{gnn_forward.1} parent=0 // loop_body
    %s15 = ssub.s32 %s10, 1
    %s16 = ssub.s32 %s10, 2
    %s17 = sadd.s32 %s10, 1
    %s18 = ssub.s32 %s10, %s17
    %p19 = scmp.eq.s32.totalorder %s18, 0
    %s21 = sadd.s32 %s20, 1
    %s22 = scalar_select %p19, %s20, %s21
    %p25 = pneg %p19
    %p26 = scmp.eq.s32.totalorder %s10, 1
    %p27 = por %p25, %p26
    %p28 = scmp.ne.s32.totalorder %s20, %s23
    %p29 = scmp.eq.s32.totalorder %s10, 0
    %p30 = por %p28, %p29
    %p31 = scmp.ne.s32.totalorder %s20, %s23
    %p32 = scmp.eq.s32.totalorder %s15, 1
    %p33 = por %p31, %p32
    %p34 = scmp.ne.s32.totalorder %s23, %s24
    %p35 = scmp.eq.s32.totalorder %s15, 0
    %p36 = por %p34, %p35
    %p37 = scmp.ne.s32.totalorder %s23, %s24
    %p38 = scmp.eq.s32.totalorder %s16, 1
    %p39 = por %p37, %p38
    %p41 = scmp.ne.s32.totalorder %s24, %s40
    %p42 = scmp.eq.s32.totalorder %s16, 0
    %p43 = por %p41, %p42
    %s44 = ssub.s32 %s10, %s17
    %p45 = scmp.eq.s32.totalorder %s44, 0
    %s47 = sadd.s32 %s46, 1
    %s48 = scalar_select %p45, %s46, %s47
    %p51 = pneg %p45
    %p52 = scmp.eq.s32.totalorder %s10, 1
    %p53 = por %p51, %p52
    %p54 = scmp.ne.s32.totalorder %s46, %s49
    %p55 = scmp.eq.s32.totalorder %s10, 0
    %p56 = por %p54, %p55
    %p57 = scmp.ne.s32.totalorder %s46, %s49
    %p58 = scmp.eq.s32.totalorder %s15, 1
    %p59 = por %p57, %p58
    %p60 = scmp.ne.s32.totalorder %s49, %s50
    %p61 = scmp.eq.s32.totalorder %s15, 0
    %p62 = por %p60, %p61
    %p63 = scmp.ne.s32.totalorder %s49, %s50
    %p64 = scmp.eq.s32.totalorder %s16, 1
    %p65 = por %p63, %p64
    %p67 = scmp.ne.s32.totalorder %s50, %s66
    %p68 = scmp.eq.s32.totalorder %s16, 0
    %p69 = por %p67, %p68
    %s71 = sadd.s32 %s70, 1
    %p74 = scmp.eq.s32.totalorder %s10, 1
    %p75 = scmp.ne.s32.totalorder %s70, %s72
    %p76 = scmp.eq.s32.totalorder %s10, 0
    %p77 = por %p75, %p76
    %p78 = scmp.ne.s32.totalorder %s70, %s72
    %p79 = scmp.eq.s32.totalorder %s15, 1
    %p80 = por %p78, %p79
    %p81 = scmp.ne.s32.totalorder %s72, %s73
    %p82 = scmp.eq.s32.totalorder %s15, 0
    %p83 = por %p81, %p82
    %p84 = scmp.ne.s32.totalorder %s72, %s73
    %p85 = scmp.eq.s32.totalorder %s16, 1
    %p86 = por %p84, %p85
    %p88 = scmp.ne.s32.totalorder %s73, %s87
    %p89 = scmp.eq.s32.totalorder %s16, 0
    %p90 = por %p88, %p89
    %s92 = sadd.s32 %s91, 1
    %p95 = scmp.eq.s32.totalorder %s10, 1
    %p96 = scmp.ne.s32.totalorder %s91, %s93
    %p97 = scmp.eq.s32.totalorder %s10, 0
    %p98 = por %p96, %p97
    %p99 = scmp.ne.s32.totalorder %s91, %s93
    %p100 = scmp.eq.s32.totalorder %s15, 1
    %p101 = por %p99, %p100
    %p102 = scmp.ne.s32.totalorder %s93, %s94
    %p103 = scmp.eq.s32.totalorder %s15, 0
    %p104 = por %p102, %p103
    %p105 = scmp.ne.s32.totalorder %s93, %s94
    %p106 = scmp.eq.s32.totalorder %s16, 1
    %p107 = por %p105, %p106
    %p109 = scmp.ne.s32.totalorder %s94, %s108
    %p110 = scmp.eq.s32.totalorder %s16, 0
    %p111 = por %p109, %p110
    %s112 = ssub.s32 %s10, %s17
    %p113 = scmp.eq.s32.totalorder %s112, 0
    %s115 = sadd.s32 %s114, 1
    %s116 = scalar_select %p113, %s114, %s115
    %p119 = pneg %p113
    %p120 = scmp.eq.s32.totalorder %s10, 1
    %p121 = por %p119, %p120
    %p122 = scmp.ne.s32.totalorder %s114, %s117
    %p123 = scmp.eq.s32.totalorder %s10, 0
    %p124 = por %p122, %p123
    %p125 = scmp.ne.s32.totalorder %s114, %s117
    %p126 = scmp.eq.s32.totalorder %s15, 1
    %p127 = por %p125, %p126
    %p128 = scmp.ne.s32.totalorder %s117, %s118
    %p129 = scmp.eq.s32.totalorder %s15, 0
    %p130 = por %p128, %p129
    %p131 = scmp.ne.s32.totalorder %s117, %s118
    %p132 = scmp.eq.s32.totalorder %s16, 1
    %p133 = por %p131, %p132
    %p135 = scmp.ne.s32.totalorder %s118, %s134
    %p136 = scmp.eq.s32.totalorder %s16, 0
    %p137 = por %p135, %p136
    %p138 = scmp.le.s32.totalorder 1, %s10
    %p139 = scmp.lt.s32.totalorder %s10, 3
    %p140 = pnand %p138, %p139
    %p141 = pneg %p140
    // Predicated region
    $region9: #{gnn_forward.1} parent=5 // pred_check
      _
    $region10: #{gnn_forward.1} parent=5 // pred_check_branch
      %143 = sbr.rel (%p140) target = $region12
    $region11: #{gnn_forward.1} parent=5 // pred_region
      %s144 = ssub.s32 %s10, 1
      // Predicated region
      $region13: #{gnn_forward.1} parent=11 // pred_check
        %p145 = pneg %p83
      $region14: #{gnn_forward.1} parent=11 // pred_check_branch
        %147 = sbr.rel (%p145) target = $region16
      $region15: #{gnn_forward.1} parent=11 // pred_region
        _
      $region16: #{gnn_forward.1} parent=11 // pred_fallthru
        _
      // Predicated region
      $region17: #{gnn_forward.1} parent=11 // pred_check
        %p148 = pneg %p104
      $region18: #{gnn_forward.1} parent=11 // pred_check_branch
        %150 = sbr.rel (%p148) target = $region20
      $region19: #{gnn_forward.1} parent=11 // pred_region
        _
      $region20: #{gnn_forward.1} parent=11 // pred_fallthru
        _
    $region12: #{gnn_forward.1} parent=5 // pred_fallthru
      _
    %p151 = scmp.lt.s32.totalorder %s10, 2
    // Predicated region
    $region21: #{gnn_forward.1} parent=5 // pred_check
      %p152 = pneg %p151
    $region22: #{gnn_forward.1} parent=5 // pred_check_branch
      %154 = sbr.rel (%p152) target = $region24
    $region23: #{gnn_forward.1} parent=5 // pred_region
      // Predicated region
      $region25: #{gnn_forward.1} parent=23 // pred_check
        %p155 = pneg %p30
      $region26: #{gnn_forward.1} parent=23 // pred_check_branch
        %157 = sbr.rel (%p155) target = $region28
      $region27: #{gnn_forward.1} parent=23 // pred_region
        %p158 = scmp.lt.s32.totalorder %s10, 1
        %s159 = scalar_select %p158, %s10, 1
        %s160 = smul.addr %s159, 16
        %s161 = smul.addr %s160, 8
        %s162 = scalar_lea.vmem %s0, %s161
      $region28: #{gnn_forward.1} parent=23 // pred_fallthru
        _
      // Predicated region
      $region29: #{gnn_forward.1} parent=23 // pred_check
        %p163 = pneg %p56
      $region30: #{gnn_forward.1} parent=23 // pred_check_branch
        %165 = sbr.rel (%p163) target = $region32
      $region31: #{gnn_forward.1} parent=23 // pred_region
        %p166 = scmp.lt.s32.totalorder %s10, 1
        %s167 = scalar_select %p166, %s10, 1
        %s168 = smul.addr %s167, 16
        %s169 = smul.addr %s168, 8
        %s170 = scalar_lea.vmem %s1, %s169
      $region32: #{gnn_forward.1} parent=23 // pred_fallthru
        _
    $region24: #{gnn_forward.1} parent=5 // pred_fallthru
      _
    %p171 = scmp.le.s32.totalorder 1, %s10
    %p172 = scmp.lt.s32.totalorder %s10, 3
    %p173 = pnand %p171, %p172
    %p174 = pneg %p173
    // Predicated region
    $region33: #{gnn_forward.1} parent=5 // pred_check
      _
    $region34: #{gnn_forward.1} parent=5 // pred_check_branch
      %176 = sbr.rel (%p173) target = $region36
    $region35: #{gnn_forward.1} parent=5 // pred_region
      %s177 = ssub.s32 %s10, 1
      %p178 = scmp.lt.s32.totalorder %s15, 1
      %s179 = scalar_select %p178, %s15, 1
      %s180 = smul.addr %s179, 16
      %s181 = smul.addr %s180, 8
      %s182 = scalar_lea.vmem %s0, %s181
      %p183 = pneg %p36
      %p184 = pneg %p33
      %p185 = scmp.lt.s32.totalorder %s15, 1
      %s186 = scalar_select %p185, %s15, 1
      %s187 = smul.addr %s186, 16
      %s188 = smul.addr %s187, 8
      %s189 = scalar_lea.vmem %s1, %s188
      %p190 = pneg %p62
      %p191 = pneg %p59
      %p192 = pneg %p83
      %p193 = pneg %p80
      %p194 = pneg %p104
      %p195 = pneg %p101
      %p196 = pneg %p130
      %p197 = pneg %p127
      %p198 = scmp.lt.s32.totalorder %s15, 1
      %s199 = scalar_select %p198, %s15, 1
      %s200 = smul.addr %s199, 16
      %s201 = smul.addr %s200, 8
      %s202 = scalar_lea.vmem %s4, %s201
      %p203 = scmp.lt.s32.totalorder %s15, 1
      %s204 = scalar_select %p203, %s15, 1
      %s205 = smul.addr %s204, 16
      %s206 = smul.addr %s205, 8
      %s207 = scalar_lea.vmem %s0, %s206
      %p208 = scmp.lt.s32.totalorder %s15, 1
      %s209 = scalar_select %p208, %s15, 1
      %s210 = smul.addr %s209, 16
      %s211 = smul.addr %s210, 8
      %s212 = scalar_lea.vmem %s1, %s211
      %p213 = scmp.lt.s32.totalorder %s15, 1
      %s214 = scalar_select %p213, %s15, 1
      %s215 = smul.addr %s214, 16
      %s216 = smul.addr %s215, 8
      %s217 = scalar_lea.vmem %s4, %s216
      %v218 = vld [vmem:[%s207] sm:$0xff]
      %v219 = vld [vmem:[%s207 + $0x8] sm:$0xff]
      %v220 = vld [vmem:[%s207 + $0x10] sm:$0xff]
      %v221 = vld [vmem:[%s207 + $0x18] sm:$0xff]
      %v222 = vld [vmem:[%s207 + $0x20] sm:$0xff]
      %v223 = vld [vmem:[%s207 + $0x28] sm:$0xff]
      %v224 = vld [vmem:[%s207 + $0x30] sm:$0xff]
      %v225 = vld [vmem:[%s207 + $0x38] sm:$0xff]
      %v226 = vld [vmem:[%s207 + $0x40] sm:$0xff]
      %v227 = vld [vmem:[%s207 + $0x48] sm:$0xff]
      %v228 = vld [vmem:[%s207 + $0x50] sm:$0xff]
      %v229 = vld [vmem:[%s207 + $0x58] sm:$0xff]
      %v230 = vld [vmem:[%s207 + $0x60] sm:$0xff]
      %v231 = vld [vmem:[%s207 + $0x68] sm:$0xff]
      %v232 = vld [vmem:[%s207 + $0x70] sm:$0xff]
      %v233 = vld [vmem:[%s207 + $0x78] sm:$0xff]
      %v234 = vld [vmem:[%s212] sm:$0xff]
      %v235 = vld [vmem:[%s212 + $0x8] sm:$0xff]
      %v236 = vld [vmem:[%s212 + $0x10] sm:$0xff]
      %v237 = vld [vmem:[%s212 + $0x18] sm:$0xff]
      %v238 = vld [vmem:[%s212 + $0x20] sm:$0xff]
      %v239 = vld [vmem:[%s212 + $0x28] sm:$0xff]
      %v240 = vld [vmem:[%s212 + $0x30] sm:$0xff]
      %v241 = vld [vmem:[%s212 + $0x38] sm:$0xff]
      %v242 = vld [vmem:[%s212 + $0x40] sm:$0xff]
      %v243 = vld [vmem:[%s212 + $0x48] sm:$0xff]
      %v244 = vld [vmem:[%s212 + $0x50] sm:$0xff]
      %v245 = vld [vmem:[%s212 + $0x58] sm:$0xff]
      %v246 = vld [vmem:[%s212 + $0x60] sm:$0xff]
      %v247 = vld [vmem:[%s212 + $0x68] sm:$0xff]
      %v248 = vld [vmem:[%s212 + $0x70] sm:$0xff]
      %v249 = vld [vmem:[%s212 + $0x78] sm:$0xff]
      %v250 = vld [vmem:[%s2] sm:$0xff]
      %v251 = vld [vmem:[%s2 + $0x8] sm:$0xff]
      %v252 = vld [vmem:[%s2 + $0x10] sm:$0xff]
      %v253 = vld [vmem:[%s2 + $0x18] sm:$0xff]
      %v254 = vld [vmem:[%s2 + $0x20] sm:$0xff]
      %v255 = vld [vmem:[%s2 + $0x28] sm:$0xff]
      %v256 = vld [vmem:[%s2 + $0x30] sm:$0xff]
      %v257 = vld [vmem:[%s2 + $0x38] sm:$0xff]
      %v258 = vld [vmem:[%s2 + $0x40] sm:$0xff]
      %v259 = vld [vmem:[%s2 + $0x48] sm:$0xff]
      %v260 = vld [vmem:[%s2 + $0x50] sm:$0xff]
      %v261 = vld [vmem:[%s2 + $0x58] sm:$0xff]
      %v262 = vld [vmem:[%s2 + $0x60] sm:$0xff]
      %v263 = vld [vmem:[%s2 + $0x68] sm:$0xff]
      %v264 = vld [vmem:[%s2 + $0x70] sm:$0xff]
      %v265 = vld [vmem:[%s2 + $0x78] sm:$0xff]
      %v266 = vld [vmem:[%s2 + $0x80] sm:$0xff]
      %v267 = vld [vmem:[%s2 + $0x88] sm:$0xff]
      %v268 = vld [vmem:[%s2 + $0x90] sm:$0xff]
      %v269 = vld [vmem:[%s2 + $0x98] sm:$0xff]
      %v270 = vld [vmem:[%s2 + $0xa0] sm:$0xff]
      %v271 = vld [vmem:[%s2 + $0xa8] sm:$0xff]
      %v272 = vld [vmem:[%s2 + $0xb0] sm:$0xff]
      %v273 = vld [vmem:[%s2 + $0xb8] sm:$0xff]
      %v274 = vld [vmem:[%s2 + $0xc0] sm:$0xff]
      %v275 = vld [vmem:[%s2 + $0xc8] sm:$0xff]
      %v276 = vld [vmem:[%s2 + $0xd0] sm:$0xff]
      %v277 = vld [vmem:[%s2 + $0xd8] sm:$0xff]
      %v278 = vld [vmem:[%s2 + $0xe0] sm:$0xff]
      %v279 = vld [vmem:[%s2 + $0xe8] sm:$0xff]
      %v280 = vld [vmem:[%s2 + $0xf0] sm:$0xff]
      %v281 = vld [vmem:[%s2 + $0xf8] sm:$0xff]
      %v282 = vld [vmem:[%s2 + $0x100] sm:$0xff]
      %v283 = vld [vmem:[%s2 + $0x108] sm:$0xff]
      %v284 = vld [vmem:[%s2 + $0x110] sm:$0xff]
      %v285 = vld [vmem:[%s2 + $0x118] sm:$0xff]
      %v286 = vld [vmem:[%s2 + $0x120] sm:$0xff]
      %v287 = vld [vmem:[%s2 + $0x128] sm:$0xff]
      %v288 = vld [vmem:[%s2 + $0x130] sm:$0xff]
      %v289 = vld [vmem:[%s2 + $0x138] sm:$0xff]
      %v290 = vld [vmem:[%s2 + $0x140] sm:$0xff]
      %v291 = vld [vmem:[%s2 + $0x148] sm:$0xff]
      %v292 = vld [vmem:[%s2 + $0x150] sm:$0xff]
      %v293 = vld [vmem:[%s2 + $0x158] sm:$0xff]
      %v294 = vld [vmem:[%s2 + $0x160] sm:$0xff]
      %v295 = vld [vmem:[%s2 + $0x168] sm:$0xff]
      %v296 = vld [vmem:[%s2 + $0x170] sm:$0xff]
      %v297 = vld [vmem:[%s2 + $0x178] sm:$0xff]
      %v298 = vld [vmem:[%s2 + $0x180] sm:$0xff]
      %v299 = vld [vmem:[%s2 + $0x188] sm:$0xff]
      %v300 = vld [vmem:[%s2 + $0x190] sm:$0xff]
      %v301 = vld [vmem:[%s2 + $0x198] sm:$0xff]
      %v302 = vld [vmem:[%s2 + $0x1a0] sm:$0xff]
      %v303 = vld [vmem:[%s2 + $0x1a8] sm:$0xff]
      %v304 = vld [vmem:[%s2 + $0x1b0] sm:$0xff]
      %v305 = vld [vmem:[%s2 + $0x1b8] sm:$0xff]
      %v306 = vld [vmem:[%s2 + $0x1c0] sm:$0xff]
      %v307 = vld [vmem:[%s2 + $0x1c8] sm:$0xff]
      %v308 = vld [vmem:[%s2 + $0x1d0] sm:$0xff]
      %v309 = vld [vmem:[%s2 + $0x1d8] sm:$0xff]
      %v310 = vld [vmem:[%s2 + $0x1e0] sm:$0xff]
      %v311 = vld [vmem:[%s2 + $0x1e8] sm:$0xff]
      %v312 = vld [vmem:[%s2 + $0x1f0] sm:$0xff]
      %v313 = vld [vmem:[%s2 + $0x1f8] sm:$0xff]
      %v314 = vld [vmem:[%s2 + $0x200] sm:$0xff]
      %v315 = vld [vmem:[%s2 + $0x208] sm:$0xff]
      %v316 = vld [vmem:[%s2 + $0x210] sm:$0xff]
      %v317 = vld [vmem:[%s2 + $0x218] sm:$0xff]
      %v318 = vld [vmem:[%s2 + $0x220] sm:$0xff]
      %v319 = vld [vmem:[%s2 + $0x228] sm:$0xff]
      %v320 = vld [vmem:[%s2 + $0x230] sm:$0xff]
      %v321 = vld [vmem:[%s2 + $0x238] sm:$0xff]
      %v322 = vld [vmem:[%s2 + $0x240] sm:$0xff]
      %v323 = vld [vmem:[%s2 + $0x248] sm:$0xff]
      %v324 = vld [vmem:[%s2 + $0x250] sm:$0xff]
      %v325 = vld [vmem:[%s2 + $0x258] sm:$0xff]
      %v326 = vld [vmem:[%s2 + $0x260] sm:$0xff]
      %v327 = vld [vmem:[%s2 + $0x268] sm:$0xff]
      %v328 = vld [vmem:[%s2 + $0x270] sm:$0xff]
      %v329 = vld [vmem:[%s2 + $0x278] sm:$0xff]
      %v330 = vld [vmem:[%s2 + $0x280] sm:$0xff]
      %v331 = vld [vmem:[%s2 + $0x288] sm:$0xff]
      %v332 = vld [vmem:[%s2 + $0x290] sm:$0xff]
      %v333 = vld [vmem:[%s2 + $0x298] sm:$0xff]
      %v334 = vld [vmem:[%s2 + $0x2a0] sm:$0xff]
      %v335 = vld [vmem:[%s2 + $0x2a8] sm:$0xff]
      %v336 = vld [vmem:[%s2 + $0x2b0] sm:$0xff]
      %v337 = vld [vmem:[%s2 + $0x2b8] sm:$0xff]
      %v338 = vld [vmem:[%s2 + $0x2c0] sm:$0xff]
      %v339 = vld [vmem:[%s2 + $0x2c8] sm:$0xff]
      %v340 = vld [vmem:[%s2 + $0x2d0] sm:$0xff]
      %v341 = vld [vmem:[%s2 + $0x2d8] sm:$0xff]
      %v342 = vld [vmem:[%s2 + $0x2e0] sm:$0xff]
      %v343 = vld [vmem:[%s2 + $0x2e8] sm:$0xff]
      %v344 = vld [vmem:[%s2 + $0x2f0] sm:$0xff]
      %v345 = vld [vmem:[%s2 + $0x2f8] sm:$0xff]
      %v346 = vld [vmem:[%s2 + $0x300] sm:$0xff]
      %v347 = vld [vmem:[%s2 + $0x308] sm:$0xff]
      %v348 = vld [vmem:[%s2 + $0x310] sm:$0xff]
      %v349 = vld [vmem:[%s2 + $0x318] sm:$0xff]
      %v350 = vld [vmem:[%s2 + $0x320] sm:$0xff]
      %v351 = vld [vmem:[%s2 + $0x328] sm:$0xff]
      %v352 = vld [vmem:[%s2 + $0x330] sm:$0xff]
      %v353 = vld [vmem:[%s2 + $0x338] sm:$0xff]
      %v354 = vld [vmem:[%s2 + $0x340] sm:$0xff]
      %v355 = vld [vmem:[%s2 + $0x348] sm:$0xff]
      %v356 = vld [vmem:[%s2 + $0x350] sm:$0xff]
      %v357 = vld [vmem:[%s2 + $0x358] sm:$0xff]
      %v358 = vld [vmem:[%s2 + $0x360] sm:$0xff]
      %v359 = vld [vmem:[%s2 + $0x368] sm:$0xff]
      %v360 = vld [vmem:[%s2 + $0x370] sm:$0xff]
      %v361 = vld [vmem:[%s2 + $0x378] sm:$0xff]
      %v362 = vld [vmem:[%s3] sm:$0x1]
      %v363 = vld [vmem:[%s3 + $0x1] sm:$0x1]
      %v364 = vld [vmem:[%s3 + $0x2] sm:$0x1]
      %v365 = vld [vmem:[%s3 + $0x3] sm:$0x1]
      %v366 = vld [vmem:[%s3 + $0x4] sm:$0x1]
      %367 = vmatprep.subr.mxu0 0.0
      %368 = vmatpush1.msra.mxu0 %v234
      %369 = vmatprep.subr.mxu0 0.0
      %370 = vmatpush1.msra.mxu0 %v235
      %371 = vmatprep.subr.mxu0 0.0
      %372 = vmatpush1.msra.mxu0 %v236
      %373 = vmatprep.subr.mxu0 0.0
      %374 = vmatpush1.msra.mxu0 %v237
      %375 = vmatprep.subr.mxu0 0.0
      %376 = vmatpush1.msra.mxu0 %v238
      %377 = vmatprep.subr.mxu0 0.0
      %378 = vmatpush1.msra.mxu0 %v239
      %379 = vmatprep.subr.mxu0 0.0
      %380 = vmatpush1.msra.mxu0 %v240
      %381 = vmatprep.subr.mxu0 0.0
      %382 = vmatpush1.msra.mxu0 %v241
      %383 = vmatprep.subr.mxu0 0.0
      %384 = vmatpush1.msra.mxu0 %v242
      %385 = vmatprep.subr.mxu0 0.0
      %386 = vmatpush1.msra.mxu0 %v243
      %387 = vmatprep.subr.mxu0 0.0
      %388 = vmatpush1.msra.mxu0 %v244
      %389 = vmatprep.subr.mxu0 0.0
      %390 = vmatpush1.msra.mxu0 %v245
      %391 = vmatprep.subr.mxu0 0.0
      %392 = vmatpush1.msra.mxu0 %v246
      %393 = vmatprep.subr.mxu0 0.0
      %394 = vmatpush1.msra.mxu0 %v247
      %395 = vmatprep.subr.mxu0 0.0
      %396 = vmatpush1.msra.mxu0 %v248
      %397 = vmatprep.subr.mxu0 0.0
      %398 = vmatpush1.msra.mxu0 %v249
      %399 = vmatprep.subr.mxu0 0.0
      %400 = vmatpush1.msra.mxu0 0.0
      %401 = vmatprep.subr.mxu0 0.0
      %402 = vmatpush1.msra.mxu0 0.0
      %403 = vmatprep.subr.mxu0 0.0
      %404 = vmatpush1.msra.mxu0 0.0
      %405 = vmatprep.subr.mxu0 0.0
      %406 = vmatpush1.msra.mxu0 0.0
      %407 = vmatprep.subr.mxu0 0.0
      %408 = vmatpush1.msra.mxu0 0.0
      %409 = vmatprep.subr.mxu0 0.0
      %410 = vmatpush1.msra.mxu0 0.0
      %411 = vmatprep.subr.mxu0 0.0
      %412 = vmatpush1.msra.mxu0 0.0
      %413 = vmatprep.subr.mxu0 0.0
      %414 = vmatpush1.msra.mxu0 0.0
      %415 = vmatprep.subr.mxu0 0.0
      %416 = vmatpush1.msra.mxu0 0.0
      %417 = vmatprep.subr.mxu0 0.0
      %418 = vmatpush1.msra.mxu0 0.0
      %419 = vmatprep.subr.mxu0 0.0
      %420 = vmatpush1.msra.mxu0 0.0
      %421 = vmatprep.subr.mxu0 0.0
      %422 = vmatpush1.msra.mxu0 0.0
      %423 = vmatprep.subr.mxu0 0.0
      %424 = vmatpush1.msra.mxu0 0.0
      %425 = vmatprep.subr.mxu0 0.0
      %426 = vmatpush1.msra.mxu0 0.0
      %427 = vmatprep.subr.mxu0 0.0
      %428 = vmatpush1.msra.mxu0 0.0
      %429 = vmatprep.subr.mxu0 0.0
      %430 = vmatpush1.msra.mxu0 0.0
      %431 = vmatprep.mubr.f32.mxu0 0.0
      %432 = vmatmul.mubr.f32.gmra.mrb[0].mxu0 %v218
      %v433 = vpop.f32.mrb[0].mxu0
      %v434 = vadd.f32 0.0, %v433
      %v435 = vpop.f32.mrb[0].mxu0
      %436 = vmatprep.mubr.f32.mxu0 0.0
      %437 = vmatmul.mubr.f32.gmra.mrb[0].mxu0 %v219
      %v438 = vpop.f32.mrb[0].mxu0
      %v439 = vadd.f32 0.0, %v438
      %v440 = vpop.f32.mrb[0].mxu0
      %441 = vmatprep.mubr.f32.mxu0 0.0
      %442 = vmatmul.mubr.f32.gmra.mrb[0].mxu0 %v220
      %v443 = vpop.f32.mrb[0].mxu0
      %v444 = vadd.f32 0.0, %v443
      %v445 = vpop.f32.mrb[0].mxu0
      %446 = vmatprep.mubr.f32.mxu0 0.0
      %447 = vmatmul.mubr.f32.gmra.mrb[0].mxu0 %v221
      %v448 = vpop.f32.mrb[0].mxu0
      %v449 = vadd.f32 0.0, %v448
      %v450 = vpop.f32.mrb[0].mxu0
      %451 = vmatprep.mubr.f32.mxu0 0.0
      %452 = vmatmul.mubr.f32.gmra.mrb[0].mxu0 %v222
      %v453 = vpop.f32.mrb[0].mxu0
      %v454 = vadd.f32 0.0, %v453
      %v455 = vpop.f32.mrb[0].mxu0
      %456 = vmatprep.mubr.f32.mxu0 0.0
      %457 = vmatmul.mubr.f32.gmra.mrb[0].mxu0 %v223
      %v458 = vpop.f32.mrb[0].mxu0
      %v459 = vadd.f32 0.0, %v458
      %v460 = vpop.f32.mrb[0].mxu0
      %461 = vmatprep.mubr.f32.mxu0 0.0
      %462 = vmatmul.mubr.f32.gmra.mrb[0].mxu0 %v224
      %v463 = vpop.f32.mrb[0].mxu0
      %v464 = vadd.f32 0.0, %v463
      %v465 = vpop.f32.mrb[0].mxu0
      %466 = vmatprep.mubr.f32.mxu0 0.0
      %467 = vmatmul.mubr.f32.gmra.mrb[0].mxu0 %v225
      %v468 = vpop.f32.mrb[0].mxu0
      %v469 = vadd.f32 0.0, %v468
      %v470 = vpop.f32.mrb[0].mxu0
      %471 = vmatprep.mubr.f32.mxu0 0.0
      %472 = vmatmul.mubr.f32.gmra.mrb[0].mxu0 %v226
      %v473 = vpop.f32.mrb[0].mxu0
      %v474 = vadd.f32 0.0, %v473
      %v475 = vpop.f32.mrb[0].mxu0
      %476 = vmatprep.mubr.f32.mxu0 0.0
      %477 = vmatmul.mubr.f32.gmra.mrb[0].mxu0 %v227
      %v478 = vpop.f32.mrb[0].mxu0
      %v479 = vadd.f32 0.0, %v478
      %v480 = vpop.f32.mrb[0].mxu0
      %481 = vmatprep.mubr.f32.mxu0 0.0
      %482 = vmatmul.mubr.f32.gmra.mrb[0].mxu0 %v228
      %v483 = vpop.f32.mrb[0].mxu0
      %v484 = vadd.f32 0.0, %v483
      %v485 = vpop.f32.mrb[0].mxu0
      %486 = vmatprep.mubr.f32.mxu0 0.0
      %487 = vmatmul.mubr.f32.gmra.mrb[0].mxu0 %v229
      %v488 = vpop.f32.mrb[0].mxu0
      %v489 = vadd.f32 0.0, %v488
      %v490 = vpop.f32.mrb[0].mxu0
      %491 = vmatprep.mubr.f32.mxu0 0.0
      %492 = vmatmul.mubr.f32.gmra.mrb[0].mxu0 %v230
      %v493 = vpop.f32.mrb[0].mxu0
      %v494 = vadd.f32 0.0, %v493
      %v495 = vpop.f32.mrb[0].mxu0
      %496 = vmatprep.mubr.f32.mxu0 0.0
      %497 = vmatmul.mubr.f32.gmra.mrb[0].mxu0 %v231
      %v498 = vpop.f32.mrb[0].mxu0
      %v499 = vadd.f32 0.0, %v498
      %v500 = vpop.f32.mrb[0].mxu0
      %501 = vmatprep.mubr.f32.mxu0 0.0
      %502 = vmatmul.mubr.f32.gmra.mrb[0].mxu0 %v232
      %v503 = vpop.f32.mrb[0].mxu0
      %v504 = vadd.f32 0.0, %v503
      %v505 = vpop.f32.mrb[0].mxu0
      %506 = vmatprep.mubr.f32.mxu0 0.0
      %507 = vmatmul.mubr.f32.gmra.mrb[0].mxu0 %v233
      %v508 = vpop.f32.mrb[0].mxu0
      %v509 = vadd.f32 0.0, %v508
      %v510 = vpop.f32.mrb[0].mxu0
      %511 = vdwg.mxu0
      %512 = vmatprep.subr.mxu0 0.0
      %513 = vmatpush1.msra.mxu0 %v266
      %514 = vmatprep.subr.mxu0 0.0
      %515 = vmatpush1.msra.mxu0 %v267
      %516 = vmatprep.subr.mxu0 0.0
      %517 = vmatpush1.msra.mxu0 %v268
      %518 = vmatprep.subr.mxu0 0.0
      %519 = vmatpush1.msra.mxu0 %v269
      %520 = vmatprep.subr.mxu0 0.0
      %521 = vmatpush1.msra.mxu0 %v270
      %522 = vmatprep.subr.mxu0 0.0
      %523 = vmatpush1.msra.mxu0 %v271
      %524 = vmatprep.subr.mxu0 0.0
      %525 = vmatpush1.msra.mxu0 %v272
      %526 = vmatprep.subr.mxu0 0.0
      %527 = vmatpush1.msra.mxu0 %v273
      %528 = vmatprep.subr.mxu0 0.0
      %529 = vmatpush1.msra.mxu0 %v274
      %530 = vmatprep.subr.mxu0 0.0
      %531 = vmatpush1.msra.mxu0 %v275
      %532 = vmatprep.subr.mxu0 0.0
      %533 = vmatpush1.msra.mxu0 %v276
      %534 = vmatprep.subr.mxu0 0.0
      %535 = vmatpush1.msra.mxu0 %v277
      %536 = vmatprep.subr.mxu0 0.0
      %537 = vmatpush1.msra.mxu0 %v278
      %538 = vmatprep.subr.mxu0 0.0
      %539 = vmatpush1.msra.mxu0 %v279
      %540 = vmatprep.subr.mxu0 0.0
      %541 = vmatpush1.msra.mxu0 %v280
      %542 = vmatprep.subr.mxu0 0.0
      %543 = vmatpush1.msra.mxu0 %v281
      %544 = vmatprep.subr.mxu0 0.0
      %545 = vmatpush1.msra.mxu0 0.0
      %546 = vmatprep.subr.mxu0 0.0
      %547 = vmatpush1.msra.mxu0 0.0
      %548 = vmatprep.subr.mxu0 0.0
      %549 = vmatpush1.msra.mxu0 0.0
      %550 = vmatprep.subr.mxu0 0.0
      %551 = vmatpush1.msra.mxu0 0.0
      %552 = vmatprep.subr.mxu0 0.0
      %553 = vmatpush1.msra.mxu0 0.0
      %554 = vmatprep.subr.mxu0 0.0
      %555 = vmatpush1.msra.mxu0 0.0
      %556 = vmatprep.subr.mxu0 0.0
      %557 = vmatpush1.msra.mxu0 0.0
      %558 = vmatprep.subr.mxu0 0.0
      %559 = vmatpush1.msra.mxu0 0.0
      %560 = vmatprep.subr.mxu0 0.0
      %561 = vmatpush1.msra.mxu0 0.0
      %562 = vmatprep.subr.mxu0 0.0
      %563 = vmatpush1.msra.mxu0 0.0
      %564 = vmatprep.subr.mxu0 0.0
      %565 = vmatpush1.msra.mxu0 0.0
      %566 = vmatprep.subr.mxu0 0.0
      %567 = vmatpush1.msra.mxu0 0.0
      %568 = vmatprep.subr.mxu0 0.0
      %569 = vmatpush1.msra.mxu0 0.0
      %570 = vmatprep.subr.mxu0 0.0
      %571 = vmatpush1.msra.mxu0 0.0
      %572 = vmatprep.subr.mxu0 0.0
      %573 = vmatpush1.msra.mxu0 0.0
      %574 = vmatprep.subr.mxu0 0.0
      %575 = vmatpush1.msra.mxu0 0.0
      %576 = vmatprep.mubr.f32.mxu0 0.0
      %577 = vmatmul.mubr.f32.gmra.mrb[0].mxu0 %v234
      %v578 = vpop.f32.mrb[0].mxu0
      %v579 = vadd.f32 0.0, %v578
      %v580 = vpop.f32.mrb[0].mxu0
      %581 = vmatprep.mubr.f32.mxu0 0.0
      %582 = vmatmul.mubr.f32.gmra.mrb[0].mxu0 %v235
      %v583 = vpop.f32.mrb[0].mxu0
      %v584 = vadd.f32 0.0, %v583
      %v585 = vpop.f32.mrb[0].mxu0
      %586 = vmatprep.mubr.f32.mxu0 0.0
      %587 = vmatmul.mubr.f32.gmra.mrb[0].mxu0 %v236
      %v588 = vpop.f32.mrb[0].mxu0
      %v589 = vadd.f32 0.0, %v588
      %v590 = vpop.f32.mrb[0].mxu0
      %591 = vmatprep.mubr.f32.mxu0 0.0
      %592 = vmatmul.mubr.f32.gmra.mrb[0].mxu0 %v237
      %v593 = vpop.f32.mrb[0].mxu0
      %v594 = vadd.f32 0.0, %v593
      %v595 = vpop.f32.mrb[0].mxu0
      %596 = vmatprep.mubr.f32.mxu0 0.0
      %597 = vmatmul.mubr.f32.gmra.mrb[0].mxu0 %v238
      %v598 = vpop.f32.mrb[0].mxu0
      %v599 = vadd.f32 0.0, %v598
      %v600 = vpop.f32.mrb[0].mxu0
      %601 = vmatprep.mubr.f32.mxu0 0.0
      %602 = vmatmul.mubr.f32.gmra.mrb[0].mxu0 %v239
      %v603 = vpop.f32.mrb[0].mxu0
      %v604 = vadd.f32 0.0, %v603
      %v605 = vpop.f32.mrb[0].mxu0
      %606 = vmatprep.mubr.f32.mxu0 0.0
      %607 = vmatmul.mubr.f32.gmra.mrb[0].mxu0 %v240
      %v608 = vpop.f32.mrb[0].mxu0
      %v609 = vadd.f32 0.0, %v608
      %v610 = vpop.f32.mrb[0].mxu0
      %611 = vmatprep.mubr.f32.mxu0 0.0
      %612 = vmatmul.mubr.f32.gmra.mrb[0].mxu0 %v241
      %v613 = vpop.f32.mrb[0].mxu0
      %v614 = vadd.f32 0.0, %v613
      %v615 = vpop.f32.mrb[0].mxu0
      %616 = vmatprep.mubr.f32.mxu0 0.0
      %617 = vmatmul.mubr.f32.gmra.mrb[0].mxu0 %v242
      %v618 = vpop.f32.mrb[0].mxu0
      %v619 = vadd.f32 0.0, %v618
      %v620 = vpop.f32.mrb[0].mxu0
      %621 = vmatprep.mubr.f32.mxu0 0.0
      %622 = vmatmul.mubr.f32.gmra.mrb[0].mxu0 %v243
      %v623 = vpop.f32.mrb[0].mxu0
      %v624 = vadd.f32 0.0, %v623
      %v625 = vpop.f32.mrb[0].mxu0
      %626 = vmatprep.mubr.f32.mxu0 0.0
      %627 = vmatmul.mubr.f32.gmra.mrb[0].mxu0 %v244
      %v628 = vpop.f32.mrb[0].mxu0
      %v629 = vadd.f32 0.0, %v628
      %v630 = vpop.f32.mrb[0].mxu0
      %631 = vmatprep.mubr.f32.mxu0 0.0
      %632 = vmatmul.mubr.f32.gmra.mrb[0].mxu0 %v245
      %v633 = vpop.f32.mrb[0].mxu0
      %v634 = vadd.f32 0.0, %v633
      %v635 = vpop.f32.mrb[0].mxu0
      %636 = vmatprep.mubr.f32.mxu0 0.0
      %637 = vmatmul.mubr.f32.gmra.mrb[0].mxu0 %v246
      %v638 = vpop.f32.mrb[0].mxu0
      %v639 = vadd.f32 0.0, %v638
      %v640 = vpop.f32.mrb[0].mxu0
      %641 = vmatprep.mubr.f32.mxu0 0.0
      %642 = vmatmul.mubr.f32.gmra.mrb[0].mxu0 %v247
      %v643 = vpop.f32.mrb[0].mxu0
      %v644 = vadd.f32 0.0, %v643
      %v645 = vpop.f32.mrb[0].mxu0
      %646 = vmatprep.mubr.f32.mxu0 0.0
      %647 = vmatmul.mubr.f32.gmra.mrb[0].mxu0 %v248
      %v648 = vpop.f32.mrb[0].mxu0
      %v649 = vadd.f32 0.0, %v648
      %v650 = vpop.f32.mrb[0].mxu0
      %651 = vmatprep.mubr.f32.mxu0 0.0
      %652 = vmatmul.mubr.f32.gmra.mrb[0].mxu0 %v249
      %v653 = vpop.f32.mrb[0].mxu0
      %v654 = vadd.f32 0.0, %v653
      %v655 = vpop.f32.mrb[0].mxu0
      %656 = vdwg.mxu0
      %657 = vmatprep.subr.mxu0 0.0
      %658 = vmatpush1.msra.mxu0 %v250
      %659 = vmatprep.subr.mxu0 0.0
      %660 = vmatpush1.msra.mxu0 %v251
      %661 = vmatprep.subr.mxu0 0.0
      %662 = vmatpush1.msra.mxu0 %v252
      %663 = vmatprep.subr.mxu0 0.0
      %664 = vmatpush1.msra.mxu0 %v253
      %665 = vmatprep.subr.mxu0 0.0
      %666 = vmatpush1.msra.mxu0 %v254
      %667 = vmatprep.subr.mxu0 0.0
      %668 = vmatpush1.msra.mxu0 %v255
      %669 = vmatprep.subr.mxu0 0.0
      %670 = vmatpush1.msra.mxu0 %v256
      %671 = vmatprep.subr.mxu0 0.0
      %672 = vmatpush1.msra.mxu0 %v257
      %673 = vmatprep.subr.mxu0 0.0
      %674 = vmatpush1.msra.mxu0 %v258
      %675 = vmatprep.subr.mxu0 0.0
      %676 = vmatpush1.msra.mxu0 %v259
      %677 = vmatprep.subr.mxu0 0.0
      %678 = vmatpush1.msra.mxu0 %v260
      %679 = vmatprep.subr.mxu0 0.0
      %680 = vmatpush1.msra.mxu0 %v261
      %681 = vmatprep.subr.mxu0 0.0
      %682 = vmatpush1.msra.mxu0 %v262
      %683 = vmatprep.subr.mxu0 0.0
      %684 = vmatpush1.msra.mxu0 %v263
      %685 = vmatprep.subr.mxu0 0.0
      %686 = vmatpush1.msra.mxu0 %v264
      %687 = vmatprep.subr.mxu0 0.0
      %688 = vmatpush1.msra.mxu0 %v265
      %689 = vmatprep.subr.mxu0 0.0
      %690 = vmatpush1.msra.mxu0 0.0
      %691 = vmatprep.subr.mxu0 0.0
      %692 = vmatpush1.msra.mxu0 0.0
      %693 = vmatprep.subr.mxu0 0.0
      %694 = vmatpush1.msra.mxu0 0.0
      %695 = vmatprep.subr.mxu0 0.0
      %696 = vmatpush1.msra.mxu0 0.0
      %697 = vmatprep.subr.mxu0 0.0
      %698 = vmatpush1.msra.mxu0 0.0
      %699 = vmatprep.subr.mxu0 0.0
      %700 = vmatpush1.msra.mxu0 0.0
      %701 = vmatprep.subr.mxu0 0.0
      %702 = vmatpush1.msra.mxu0 0.0
      %703 = vmatprep.subr.mxu0 0.0
      %704 = vmatpush1.msra.mxu0 0.0
      %705 = vmatprep.subr.mxu0 0.0
      %706 = vmatpush1.msra.mxu0 0.0
      %707 = vmatprep.subr.mxu0 0.0
      %708 = vmatpush1.msra.mxu0 0.0
      %709 = vmatprep.subr.mxu0 0.0
      %710 = vmatpush1.msra.mxu0 0.0
      %711 = vmatprep.subr.mxu0 0.0
      %712 = vmatpush1.msra.mxu0 0.0
      %713 = vmatprep.subr.mxu0 0.0
      %714 = vmatpush1.msra.mxu0 0.0
      %715 = vmatprep.subr.mxu0 0.0
      %716 = vmatpush1.msra.mxu0 0.0
      %717 = vmatprep.subr.mxu0 0.0
      %718 = vmatpush1.msra.mxu0 0.0
      %719 = vmatprep.subr.mxu0 0.0
      %720 = vmatpush1.msra.mxu0 0.0
      %721 = vmatprep.mubr.f32.mxu0 0.0
      %722 = vmatmul.mubr.f32.gmra.mrb[0].mxu0 %v434
      %v723 = vpop.f32.mrb[0].mxu0
      %v724 = vadd.f32 %v579, %v723
      %v725 = vpop.f32.mrb[0].mxu0
      %726 = vmatprep.mubr.f32.mxu0 0.0
      %727 = vmatmul.mubr.f32.gmra.mrb[0].mxu0 %v439
      %v728 = vpop.f32.mrb[0].mxu0
      %v729 = vadd.f32 %v584, %v728
      %v730 = vpop.f32.mrb[0].mxu0
      %731 = vmatprep.mubr.f32.mxu0 0.0
      %732 = vmatmul.mubr.f32.gmra.mrb[0].mxu0 %v444
      %v733 = vpop.f32.mrb[0].mxu0
      %v734 = vadd.f32 %v589, %v733
      %v735 = vpop.f32.mrb[0].mxu0
      %736 = vmatprep.mubr.f32.mxu0 0.0
      %737 = vmatmul.mubr.f32.gmra.mrb[0].mxu0 %v449
      %v738 = vpop.f32.mrb[0].mxu0
      %v739 = vadd.f32 %v594, %v738
      %v740 = vpop.f32.mrb[0].mxu0
      %741 = vmatprep.mubr.f32.mxu0 0.0
      %742 = vmatmul.mubr.f32.gmra.mrb[0].mxu0 %v454
      %v743 = vpop.f32.mrb[0].mxu0
      %v744 = vadd.f32 %v599, %v743
      %v745 = vpop.f32.mrb[0].mxu0
      %746 = vmatprep.mubr.f32.mxu0 0.0
      %747 = vmatmul.mubr.f32.gmra.mrb[0].mxu0 %v459
      %v748 = vpop.f32.mrb[0].mxu0
      %v749 = vadd.f32 %v604, %v748
      %v750 = vpop.f32.mrb[0].mxu0
      %751 = vmatprep.mubr.f32.mxu0 0.0
      %752 = vmatmul.mubr.f32.gmra.mrb[0].mxu0 %v464
      %v753 = vpop.f32.mrb[0].mxu0
      %v754 = vadd.f32 %v609, %v753
      %v755 = vpop.f32.mrb[0].mxu0
      %756 = vmatprep.mubr.f32.mxu0 0.0
      %757 = vmatmul.mubr.f32.gmra.mrb[0].mxu0 %v469
      %v758 = vpop.f32.mrb[0].mxu0
      %v759 = vadd.f32 %v614, %v758
      %v760 = vpop.f32.mrb[0].mxu0
      %761 = vmatprep.mubr.f32.mxu0 0.0
      %762 = vmatmul.mubr.f32.gmra.mrb[0].mxu0 %v474
      %v763 = vpop.f32.mrb[0].mxu0
      %v764 = vadd.f32 %v619, %v763
      %v765 = vpop.f32.mrb[0].mxu0
      %766 = vmatprep.mubr.f32.mxu0 0.0
      %767 = vmatmul.mubr.f32.gmra.mrb[0].mxu0 %v479
      %v768 = vpop.f32.mrb[0].mxu0
      %v769 = vadd.f32 %v624, %v768
      %v770 = vpop.f32.mrb[0].mxu0
      %771 = vmatprep.mubr.f32.mxu0 0.0
      %772 = vmatmul.mubr.f32.gmra.mrb[0].mxu0 %v484
      %v773 = vpop.f32.mrb[0].mxu0
      %v774 = vadd.f32 %v629, %v773
      %v775 = vpop.f32.mrb[0].mxu0
      %776 = vmatprep.mubr.f32.mxu0 0.0
      %777 = vmatmul.mubr.f32.gmra.mrb[0].mxu0 %v489
      %v778 = vpop.f32.mrb[0].mxu0
      %v779 = vadd.f32 %v634, %v778
      %v780 = vpop.f32.mrb[0].mxu0
      %781 = vmatprep.mubr.f32.mxu0 0.0
      %782 = vmatmul.mubr.f32.gmra.mrb[0].mxu0 %v494
      %v783 = vpop.f32.mrb[0].mxu0
      %v784 = vadd.f32 %v639, %v783
      %v785 = vpop.f32.mrb[0].mxu0
      %786 = vmatprep.mubr.f32.mxu0 0.0
      %787 = vmatmul.mubr.f32.gmra.mrb[0].mxu0 %v499
      %v788 = vpop.f32.mrb[0].mxu0
      %v789 = vadd.f32 %v644, %v788
      %v790 = vpop.f32.mrb[0].mxu0
      %791 = vmatprep.mubr.f32.mxu0 0.0
      %792 = vmatmul.mubr.f32.gmra.mrb[0].mxu0 %v504
      %v793 = vpop.f32.mrb[0].mxu0
      %v794 = vadd.f32 %v649, %v793
      %v795 = vpop.f32.mrb[0].mxu0
      %796 = vmatprep.mubr.f32.mxu0 0.0
      %797 = vmatmul.mubr.f32.gmra.mrb[0].mxu0 %v509
      %v798 = vpop.f32.mrb[0].mxu0
      %v799 = vadd.f32 %v654, %v798
      %v800 = vpop.f32.mrb[0].mxu0
      %801 = vdwg.mxu0
      %v802 = vlaneseq
      %v803 = vshrl.u32 %v802, 7
      %v804 = vsub.s32 0, %v803
      %v805 = vrot.slane %v362, %v804
      %v806 = vadd.f32 %v724, %v805
      %v807 = vadd.f32 %v729, %v805
      %v808 = vadd.f32 %v734, %v805
      %v809 = vadd.f32 %v739, %v805
      %v810 = vadd.f32 %v744, %v805
      %v811 = vadd.f32 %v749, %v805
      %v812 = vadd.f32 %v754, %v805
      %v813 = vadd.f32 %v759, %v805
      %v814 = vadd.f32 %v764, %v805
      %v815 = vadd.f32 %v769, %v805
      %v816 = vadd.f32 %v774, %v805
      %v817 = vadd.f32 %v779, %v805
      %v818 = vadd.f32 %v784, %v805
      %v819 = vadd.f32 %v789, %v805
      %v820 = vadd.f32 %v794, %v805
      %v821 = vadd.f32 %v799, %v805
      %v822 = vmax.f32 %v806, 0.0
      %v823 = vmax.f32 %v807, 0.0
      %v824 = vmax.f32 %v808, 0.0
      %v825 = vmax.f32 %v809, 0.0
      %v826 = vmax.f32 %v810, 0.0
      %v827 = vmax.f32 %v811, 0.0
      %v828 = vmax.f32 %v812, 0.0
      %v829 = vmax.f32 %v813, 0.0
      %v830 = vmax.f32 %v814, 0.0
      %v831 = vmax.f32 %v815, 0.0
      %v832 = vmax.f32 %v816, 0.0
      %v833 = vmax.f32 %v817, 0.0
      %v834 = vmax.f32 %v818, 0.0
      %v835 = vmax.f32 %v819, 0.0
      %v836 = vmax.f32 %v820, 0.0
      %v837 = vmax.f32 %v821, 0.0
      %838 = vmatprep.subr.mxu0 0.0
      %839 = vmatpush1.msra.mxu0 %v822
      %840 = vmatprep.subr.mxu0 0.0
      %841 = vmatpush1.msra.mxu0 %v823
      %842 = vmatprep.subr.mxu0 0.0
      %843 = vmatpush1.msra.mxu0 %v824
      %844 = vmatprep.subr.mxu0 0.0
      %845 = vmatpush1.msra.mxu0 %v825
      %846 = vmatprep.subr.mxu0 0.0
      %847 = vmatpush1.msra.mxu0 %v826
      %848 = vmatprep.subr.mxu0 0.0
      %849 = vmatpush1.msra.mxu0 %v827
      %850 = vmatprep.subr.mxu0 0.0
      %851 = vmatpush1.msra.mxu0 %v828
      %852 = vmatprep.subr.mxu0 0.0
      %853 = vmatpush1.msra.mxu0 %v829
      %854 = vmatprep.subr.mxu0 0.0
      %855 = vmatpush1.msra.mxu0 %v830
      %856 = vmatprep.subr.mxu0 0.0
      %857 = vmatpush1.msra.mxu0 %v831
      %858 = vmatprep.subr.mxu0 0.0
      %859 = vmatpush1.msra.mxu0 %v832
      %860 = vmatprep.subr.mxu0 0.0
      %861 = vmatpush1.msra.mxu0 %v833
      %862 = vmatprep.subr.mxu0 0.0
      %863 = vmatpush1.msra.mxu0 %v834
      %864 = vmatprep.subr.mxu0 0.0
      %865 = vmatpush1.msra.mxu0 %v835
      %866 = vmatprep.subr.mxu0 0.0
      %867 = vmatpush1.msra.mxu0 %v836
      %868 = vmatprep.subr.mxu0 0.0
      %869 = vmatpush1.msra.mxu0 %v837
      %870 = vmatprep.subr.mxu0 0.0
      %871 = vmatpush1.msra.mxu0 0.0
      %872 = vmatprep.subr.mxu0 0.0
      %873 = vmatpush1.msra.mxu0 0.0
      %874 = vmatprep.subr.mxu0 0.0
      %875 = vmatpush1.msra.mxu0 0.0
      %876 = vmatprep.subr.mxu0 0.0
      %877 = vmatpush1.msra.mxu0 0.0
      %878 = vmatprep.subr.mxu0 0.0
      %879 = vmatpush1.msra.mxu0 0.0
      %880 = vmatprep.subr.mxu0 0.0
      %881 = vmatpush1.msra.mxu0 0.0
      %882 = vmatprep.subr.mxu0 0.0
      %883 = vmatpush1.msra.mxu0 0.0
      %884 = vmatprep.subr.mxu0 0.0
      %885 = vmatpush1.msra.mxu0 0.0
      %886 = vmatprep.subr.mxu0 0.0
      %887 = vmatpush1.msra.mxu0 0.0
      %888 = vmatprep.subr.mxu0 0.0
      %889 = vmatpush1.msra.mxu0 0.0
      %890 = vmatprep.subr.mxu0 0.0
      %891 = vmatpush1.msra.mxu0 0.0
      %892 = vmatprep.subr.mxu0 0.0
      %893 = vmatpush1.msra.mxu0 0.0
      %894 = vmatprep.subr.mxu0 0.0
      %895 = vmatpush1.msra.mxu0 0.0
      %896 = vmatprep.subr.mxu0 0.0
      %897 = vmatpush1.msra.mxu0 0.0
      %898 = vmatprep.subr.mxu0 0.0
      %899 = vmatpush1.msra.mxu0 0.0
      %900 = vmatprep.subr.mxu0 0.0
      %901 = vmatpush1.msra.mxu0 0.0
      %902 = vmatprep.mubr.f32.mxu0 0.0
      %903 = vmatmul.mubr.f32.gmra.mrb[0].mxu0 %v218
      %v904 = vpop.f32.mrb[0].mxu0
      %v905 = vadd.f32 0.0, %v904
      %v906 = vpop.f32.mrb[0].mxu0
      %907 = vmatprep.mubr.f32.mxu0 0.0
      %908 = vmatmul.mubr.f32.gmra.mrb[0].mxu0 %v219
      %v909 = vpop.f32.mrb[0].mxu0
      %v910 = vadd.f32 0.0, %v909
      %v911 = vpop.f32.mrb[0].mxu0
      %912 = vmatprep.mubr.f32.mxu0 0.0
      %913 = vmatmul.mubr.f32.gmra.mrb[0].mxu0 %v220
      %v914 = vpop.f32.mrb[0].mxu0
      %v915 = vadd.f32 0.0, %v914
      %v916 = vpop.f32.mrb[0].mxu0
      %917 = vmatprep.mubr.f32.mxu0 0.0
      %918 = vmatmul.mubr.f32.gmra.mrb[0].mxu0 %v221
      %v919 = vpop.f32.mrb[0].mxu0
      %v920 = vadd.f32 0.0, %v919
      %v921 = vpop.f32.mrb[0].mxu0
      %922 = vmatprep.mubr.f32.mxu0 0.0
      %923 = vmatmul.mubr.f32.gmra.mrb[0].mxu0 %v222
      %v924 = vpop.f32.mrb[0].mxu0
      %v925 = vadd.f32 0.0, %v924
      %v926 = vpop.f32.mrb[0].mxu0
      %927 = vmatprep.mubr.f32.mxu0 0.0
      %928 = vmatmul.mubr.f32.gmra.mrb[0].mxu0 %v223
      %v929 = vpop.f32.mrb[0].mxu0
      %v930 = vadd.f32 0.0, %v929
      %v931 = vpop.f32.mrb[0].mxu0
      %932 = vmatprep.mubr.f32.mxu0 0.0
      %933 = vmatmul.mubr.f32.gmra.mrb[0].mxu0 %v224
      %v934 = vpop.f32.mrb[0].mxu0
      %v935 = vadd.f32 0.0, %v934
      %v936 = vpop.f32.mrb[0].mxu0
      %937 = vmatprep.mubr.f32.mxu0 0.0
      %938 = vmatmul.mubr.f32.gmra.mrb[0].mxu0 %v225
      %v939 = vpop.f32.mrb[0].mxu0
      %v940 = vadd.f32 0.0, %v939
      %v941 = vpop.f32.mrb[0].mxu0
      %942 = vmatprep.mubr.f32.mxu0 0.0
      %943 = vmatmul.mubr.f32.gmra.mrb[0].mxu0 %v226
      %v944 = vpop.f32.mrb[0].mxu0
      %v945 = vadd.f32 0.0, %v944
      %v946 = vpop.f32.mrb[0].mxu0
      %947 = vmatprep.mubr.f32.mxu0 0.0
      %948 = vmatmul.mubr.f32.gmra.mrb[0].mxu0 %v227
      %v949 = vpop.f32.mrb[0].mxu0
      %v950 = vadd.f32 0.0, %v949
      %v951 = vpop.f32.mrb[0].mxu0
      %952 = vmatprep.mubr.f32.mxu0 0.0
      %953 = vmatmul.mubr.f32.gmra.mrb[0].mxu0 %v228
      %v954 = vpop.f32.mrb[0].mxu0
      %v955 = vadd.f32 0.0, %v954
      %v956 = vpop.f32.mrb[0].mxu0
      %957 = vmatprep.mubr.f32.mxu0 0.0
      %958 = vmatmul.mubr.f32.gmra.mrb[0].mxu0 %v229
      %v959 = vpop.f32.mrb[0].mxu0
      %v960 = vadd.f32 0.0, %v959
      %v961 = vpop.f32.mrb[0].mxu0
      %962 = vmatprep.mubr.f32.mxu0 0.0
      %963 = vmatmul.mubr.f32.gmra.mrb[0].mxu0 %v230
      %v964 = vpop.f32.mrb[0].mxu0
      %v965 = vadd.f32 0.0, %v964
      %v966 = vpop.f32.mrb[0].mxu0
      %967 = vmatprep.mubr.f32.mxu0 0.0
      %968 = vmatmul.mubr.f32.gmra.mrb[0].mxu0 %v231
      %v969 = vpop.f32.mrb[0].mxu0
      %v970 = vadd.f32 0.0, %v969
      %v971 = vpop.f32.mrb[0].mxu0
      %972 = vmatprep.mubr.f32.mxu0 0.0
      %973 = vmatmul.mubr.f32.gmra.mrb[0].mxu0 %v232
      %v974 = vpop.f32.mrb[0].mxu0
      %v975 = vadd.f32 0.0, %v974
      %v976 = vpop.f32.mrb[0].mxu0
      %977 = vmatprep.mubr.f32.mxu0 0.0
      %978 = vmatmul.mubr.f32.gmra.mrb[0].mxu0 %v233
      %v979 = vpop.f32.mrb[0].mxu0
      %v980 = vadd.f32 0.0, %v979
      %v981 = vpop.f32.mrb[0].mxu0
      %982 = vdwg.mxu0
      %983 = vmatprep.subr.mxu0 0.0
      %984 = vmatpush1.msra.mxu0 %v298
      %985 = vmatprep.subr.mxu0 0.0
      %986 = vmatpush1.msra.mxu0 %v299
      %987 = vmatprep.subr.mxu0 0.0
      %988 = vmatpush1.msra.mxu0 %v300
      %989 = vmatprep.subr.mxu0 0.0
      %990 = vmatpush1.msra.mxu0 %v301
      %991 = vmatprep.subr.mxu0 0.0
      %992 = vmatpush1.msra.mxu0 %v302
      %993 = vmatprep.subr.mxu0 0.0
      %994 = vmatpush1.msra.mxu0 %v303
      %995 = vmatprep.subr.mxu0 0.0
      %996 = vmatpush1.msra.mxu0 %v304
      %997 = vmatprep.subr.mxu0 0.0
      %998 = vmatpush1.msra.mxu0 %v305
      %999 = vmatprep.subr.mxu0 0.0
      %1000 = vmatpush1.msra.mxu0 %v306
      %1001 = vmatprep.subr.mxu0 0.0
      %1002 = vmatpush1.msra.mxu0 %v307
      %1003 = vmatprep.subr.mxu0 0.0
      %1004 = vmatpush1.msra.mxu0 %v308
      %1005 = vmatprep.subr.mxu0 0.0
      %1006 = vmatpush1.msra.mxu0 %v309
      %1007 = vmatprep.subr.mxu0 0.0
      %1008 = vmatpush1.msra.mxu0 %v310
      %1009 = vmatprep.subr.mxu0 0.0
      %1010 = vmatpush1.msra.mxu0 %v311
      %1011 = vmatprep.subr.mxu0 0.0
      %1012 = vmatpush1.msra.mxu0 %v312
      %1013 = vmatprep.subr.mxu0 0.0
      %1014 = vmatpush1.msra.mxu0 %v313
      %1015 = vmatprep.subr.mxu0 0.0
      %1016 = vmatpush1.msra.mxu0 0.0
      %1017 = vmatprep.subr.mxu0 0.0
      %1018 = vmatpush1.msra.mxu0 0.0
      %1019 = vmatprep.subr.mxu0 0.0
      %1020 = vmatpush1.msra.mxu0 0.0
      %1021 = vmatprep.subr.mxu0 0.0
      %1022 = vmatpush1.msra.mxu0 0.0
      %1023 = vmatprep.subr.mxu0 0.0
      %1024 = vmatpush1.msra.mxu0 0.0
      %1025 = vmatprep.subr.mxu0 0.0
      %1026 = vmatpush1.msra.mxu0 0.0
      %1027 = vmatprep.subr.mxu0 0.0
      %1028 = vmatpush1.msra.mxu0 0.0
      %1029 = vmatprep.subr.mxu0 0.0
      %1030 = vmatpush1.msra.mxu0 0.0
      %1031 = vmatprep.subr.mxu0 0.0
      %1032 = vmatpush1.msra.mxu0 0.0
      %1033 = vmatprep.subr.mxu0 0.0
      %1034 = vmatpush1.msra.mxu0 0.0
      %1035 = vmatprep.subr.mxu0 0.0
      %1036 = vmatpush1.msra.mxu0 0.0
      %1037 = vmatprep.subr.mxu0 0.0
      %1038 = vmatpush1.msra.mxu0 0.0
      %1039 = vmatprep.subr.mxu0 0.0
      %1040 = vmatpush1.msra.mxu0 0.0
      %1041 = vmatprep.subr.mxu0 0.0
      %1042 = vmatpush1.msra.mxu0 0.0
      %1043 = vmatprep.subr.mxu0 0.0
      %1044 = vmatpush1.msra.mxu0 0.0
      %1045 = vmatprep.subr.mxu0 0.0
      %1046 = vmatpush1.msra.mxu0 0.0
      %1047 = vmatprep.mubr.f32.mxu0 0.0
      %1048 = vmatmul.mubr.f32.gmra.mrb[0].mxu0 %v822
      %v1049 = vpop.f32.mrb[0].mxu0
      %v1050 = vadd.f32 0.0, %v1049
      %v1051 = vpop.f32.mrb[0].mxu0
      %1052 = vmatprep.mubr.f32.mxu0 0.0
      %1053 = vmatmul.mubr.f32.gmra.mrb[0].mxu0 %v823
      %v1054 = vpop.f32.mrb[0].mxu0
      %v1055 = vadd.f32 0.0, %v1054
      %v1056 = vpop.f32.mrb[0].mxu0
      %1057 = vmatprep.mubr.f32.mxu0 0.0
      %1058 = vmatmul.mubr.f32.gmra.mrb[0].mxu0 %v824
      %v1059 = vpop.f32.mrb[0].mxu0
      %v1060 = vadd.f32 0.0, %v1059
      %v1061 = vpop.f32.mrb[0].mxu0
      %1062 = vmatprep.mubr.f32.mxu0 0.0
      %1063 = vmatmul.mubr.f32.gmra.mrb[0].mxu0 %v825
      %v1064 = vpop.f32.mrb[0].mxu0
      %v1065 = vadd.f32 0.0, %v1064
      %v1066 = vpop.f32.mrb[0].mxu0
      %1067 = vmatprep.mubr.f32.mxu0 0.0
      %1068 = vmatmul.mubr.f32.gmra.mrb[0].mxu0 %v826
      %v1069 = vpop.f32.mrb[0].mxu0
      %v1070 = vadd.f32 0.0, %v1069
      %v1071 = vpop.f32.mrb[0].mxu0
      %1072 = vmatprep.mubr.f32.mxu0 0.0
      %1073 = vmatmul.mubr.f32.gmra.mrb[0].mxu0 %v827
      %v1074 = vpop.f32.mrb[0].mxu0
      %v1075 = vadd.f32 0.0, %v1074
      %v1076 = vpop.f32.mrb[0].mxu0
      %1077 = vmatprep.mubr.f32.mxu0 0.0
      %1078 = vmatmul.mubr.f32.gmra.mrb[0].mxu0 %v828
      %v1079 = vpop.f32.mrb[0].mxu0
      %v1080 = vadd.f32 0.0, %v1079
      %v1081 = vpop.f32.mrb[0].mxu0
      %1082 = vmatprep.mubr.f32.mxu0 0.0
      %1083 = vmatmul.mubr.f32.gmra.mrb[0].mxu0 %v829
      %v1084 = vpop.f32.mrb[0].mxu0
      %v1085 = vadd.f32 0.0, %v1084
      %v1086 = vpop.f32.mrb[0].mxu0
      %1087 = vmatprep.mubr.f32.mxu0 0.0
      %1088 = vmatmul.mubr.f32.gmra.mrb[0].mxu0 %v830
      %v1089 = vpop.f32.mrb[0].mxu0
      %v1090 = vadd.f32 0.0, %v1089
      %v1091 = vpop.f32.mrb[0].mxu0
      %1092 = vmatprep.mubr.f32.mxu0 0.0
      %1093 = vmatmul.mubr.f32.gmra.mrb[0].mxu0 %v831
      %v1094 = vpop.f32.mrb[0].mxu0
      %v1095 = vadd.f32 0.0, %v1094
      %v1096 = vpop.f32.mrb[0].mxu0
      %1097 = vmatprep.mubr.f32.mxu0 0.0
      %1098 = vmatmul.mubr.f32.gmra.mrb[0].mxu0 %v832
      %v1099 = vpop.f32.mrb[0].mxu0
      %v1100 = vadd.f32 0.0, %v1099
      %v1101 = vpop.f32.mrb[0].mxu0
      %1102 = vmatprep.mubr.f32.mxu0 0.0
      %1103 = vmatmul.mubr.f32.gmra.mrb[0].mxu0 %v833
      %v1104 = vpop.f32.mrb[0].mxu0
      %v1105 = vadd.f32 0.0, %v1104
      %v1106 = vpop.f32.mrb[0].mxu0
      %1107 = vmatprep.mubr.f32.mxu0 0.0
      %1108 = vmatmul.mubr.f32.gmra.mrb[0].mxu0 %v834
      %v1109 = vpop.f32.mrb[0].mxu0
      %v1110 = vadd.f32 0.0, %v1109
      %v1111 = vpop.f32.mrb[0].mxu0
      %1112 = vmatprep.mubr.f32.mxu0 0.0
      %1113 = vmatmul.mubr.f32.gmra.mrb[0].mxu0 %v835
      %v1114 = vpop.f32.mrb[0].mxu0
      %v1115 = vadd.f32 0.0, %v1114
      %v1116 = vpop.f32.mrb[0].mxu0
      %1117 = vmatprep.mubr.f32.mxu0 0.0
      %1118 = vmatmul.mubr.f32.gmra.mrb[0].mxu0 %v836
      %v1119 = vpop.f32.mrb[0].mxu0
      %v1120 = vadd.f32 0.0, %v1119
      %v1121 = vpop.f32.mrb[0].mxu0
      %1122 = vmatprep.mubr.f32.mxu0 0.0
      %1123 = vmatmul.mubr.f32.gmra.mrb[0].mxu0 %v837
      %v1124 = vpop.f32.mrb[0].mxu0
      %v1125 = vadd.f32 0.0, %v1124
      %v1126 = vpop.f32.mrb[0].mxu0
      %1127 = vdwg.mxu0
      %1128 = vmatprep.subr.mxu0 0.0
      %1129 = vmatpush1.msra.mxu0 %v282
      %1130 = vmatprep.subr.mxu0 0.0
      %1131 = vmatpush1.msra.mxu0 %v283
      %1132 = vmatprep.subr.mxu0 0.0
      %1133 = vmatpush1.msra.mxu0 %v284
      %1134 = vmatprep.subr.mxu0 0.0
      %1135 = vmatpush1.msra.mxu0 %v285
      %1136 = vmatprep.subr.mxu0 0.0
      %1137 = vmatpush1.msra.mxu0 %v286
      %1138 = vmatprep.subr.mxu0 0.0
      %1139 = vmatpush1.msra.mxu0 %v287
      %1140 = vmatprep.subr.mxu0 0.0
      %1141 = vmatpush1.msra.mxu0 %v288
      %1142 = vmatprep.subr.mxu0 0.0
      %1143 = vmatpush1.msra.mxu0 %v289
      %1144 = vmatprep.subr.mxu0 0.0
      %1145 = vmatpush1.msra.mxu0 %v290
      %1146 = vmatprep.subr.mxu0 0.0
      %1147 = vmatpush1.msra.mxu0 %v291
      %1148 = vmatprep.subr.mxu0 0.0
      %1149 = vmatpush1.msra.mxu0 %v292
      %1150 = vmatprep.subr.mxu0 0.0
      %1151 = vmatpush1.msra.mxu0 %v293
      %1152 = vmatprep.subr.mxu0 0.0
      %1153 = vmatpush1.msra.mxu0 %v294
      %1154 = vmatprep.subr.mxu0 0.0
      %1155 = vmatpush1.msra.mxu0 %v295
      %1156 = vmatprep.subr.mxu0 0.0
      %1157 = vmatpush1.msra.mxu0 %v296
      %1158 = vmatprep.subr.mxu0 0.0
      %1159 = vmatpush1.msra.mxu0 %v297
      %1160 = vmatprep.subr.mxu0 0.0
      %1161 = vmatpush1.msra.mxu0 0.0
      %1162 = vmatprep.subr.mxu0 0.0
      %1163 = vmatpush1.msra.mxu0 0.0
      %1164 = vmatprep.subr.mxu0 0.0
      %1165 = vmatpush1.msra.mxu0 0.0
      %1166 = vmatprep.subr.mxu0 0.0
      %1167 = vmatpush1.msra.mxu0 0.0
      %1168 = vmatprep.subr.mxu0 0.0
      %1169 = vmatpush1.msra.mxu0 0.0
      %1170 = vmatprep.subr.mxu0 0.0
      %1171 = vmatpush1.msra.mxu0 0.0
      %1172 = vmatprep.subr.mxu0 0.0
      %1173 = vmatpush1.msra.mxu0 0.0
      %1174 = vmatprep.subr.mxu0 0.0
      %1175 = vmatpush1.msra.mxu0 0.0
      %1176 = vmatprep.subr.mxu0 0.0
      %1177 = vmatpush1.msra.mxu0 0.0
      %1178 = vmatprep.subr.mxu0 0.0
      %1179 = vmatpush1.msra.mxu0 0.0
      %1180 = vmatprep.subr.mxu0 0.0
      %1181 = vmatpush1.msra.mxu0 0.0
      %1182 = vmatprep.subr.mxu0 0.0
      %1183 = vmatpush1.msra.mxu0 0.0
      %1184 = vmatprep.subr.mxu0 0.0
      %1185 = vmatpush1.msra.mxu0 0.0
      %1186 = vmatprep.subr.mxu0 0.0
      %1187 = vmatpush1.msra.mxu0 0.0
      %1188 = vmatprep.subr.mxu0 0.0
      %1189 = vmatpush1.msra.mxu0 0.0
      %1190 = vmatprep.subr.mxu0 0.0
      %1191 = vmatpush1.msra.mxu0 0.0
      %1192 = vmatprep.mubr.f32.mxu0 0.0
      %1193 = vmatmul.mubr.f32.gmra.mrb[0].mxu0 %v905
      %v1194 = vpop.f32.mrb[0].mxu0
      %v1195 = vadd.f32 %v1050, %v1194
      %v1196 = vpop.f32.mrb[0].mxu0
      %1197 = vmatprep.mubr.f32.mxu0 0.0
      %1198 = vmatmul.mubr.f32.gmra.mrb[0].mxu0 %v910
      %v1199 = vpop.f32.mrb[0].mxu0
      %v1200 = vadd.f32 %v1055, %v1199
      %v1201 = vpop.f32.mrb[0].mxu0
      %1202 = vmatprep.mubr.f32.mxu0 0.0
      %1203 = vmatmul.mubr.f32.gmra.mrb[0].mxu0 %v915
      %v1204 = vpop.f32.mrb[0].mxu0
      %v1205 = vadd.f32 %v1060, %v1204
      %v1206 = vpop.f32.mrb[0].mxu0
      %1207 = vmatprep.mubr.f32.mxu0 0.0
      %1208 = vmatmul.mubr.f32.gmra.mrb[0].mxu0 %v920
      %v1209 = vpop.f32.mrb[0].mxu0
      %v1210 = vadd.f32 %v1065, %v1209
      %v1211 = vpop.f32.mrb[0].mxu0
      %1212 = vmatprep.mubr.f32.mxu0 0.0
      %1213 = vmatmul.mubr.f32.gmra.mrb[0].mxu0 %v925
      %v1214 = vpop.f32.mrb[0].mxu0
      %v1215 = vadd.f32 %v1070, %v1214
      %v1216 = vpop.f32.mrb[0].mxu0
      %1217 = vmatprep.mubr.f32.mxu0 0.0
      %1218 = vmatmul.mubr.f32.gmra.mrb[0].mxu0 %v930
      %v1219 = vpop.f32.mrb[0].mxu0
      %v1220 = vadd.f32 %v1075, %v1219
      %v1221 = vpop.f32.mrb[0].mxu0
      %1222 = vmatprep.mubr.f32.mxu0 0.0
      %1223 = vmatmul.mubr.f32.gmra.mrb[0].mxu0 %v935
      %v1224 = vpop.f32.mrb[0].mxu0
      %v1225 = vadd.f32 %v1080, %v1224
      %v1226 = vpop.f32.mrb[0].mxu0
      %1227 = vmatprep.mubr.f32.mxu0 0.0
      %1228 = vmatmul.mubr.f32.gmra.mrb[0].mxu0 %v940
      %v1229 = vpop.f32.mrb[0].mxu0
      %v1230 = vadd.f32 %v1085, %v1229
      %v1231 = vpop.f32.mrb[0].mxu0
      %1232 = vmatprep.mubr.f32.mxu0 0.0
      %1233 = vmatmul.mubr.f32.gmra.mrb[0].mxu0 %v945
      %v1234 = vpop.f32.mrb[0].mxu0
      %v1235 = vadd.f32 %v1090, %v1234
      %v1236 = vpop.f32.mrb[0].mxu0
      %1237 = vmatprep.mubr.f32.mxu0 0.0
      %1238 = vmatmul.mubr.f32.gmra.mrb[0].mxu0 %v950
      %v1239 = vpop.f32.mrb[0].mxu0
      %v1240 = vadd.f32 %v1095, %v1239
      %v1241 = vpop.f32.mrb[0].mxu0
      %1242 = vmatprep.mubr.f32.mxu0 0.0
      %1243 = vmatmul.mubr.f32.gmra.mrb[0].mxu0 %v955
      %v1244 = vpop.f32.mrb[0].mxu0
      %v1245 = vadd.f32 %v1100, %v1244
      %v1246 = vpop.f32.mrb[0].mxu0
      %1247 = vmatprep.mubr.f32.mxu0 0.0
      %1248 = vmatmul.mubr.f32.gmra.mrb[0].mxu0 %v960
      %v1249 = vpop.f32.mrb[0].mxu0
      %v1250 = vadd.f32 %v1105, %v1249
      %v1251 = vpop.f32.mrb[0].mxu0
      %1252 = vmatprep.mubr.f32.mxu0 0.0
      %1253 = vmatmul.mubr.f32.gmra.mrb[0].mxu0 %v965
      %v1254 = vpop.f32.mrb[0].mxu0
      %v1255 = vadd.f32 %v1110, %v1254
      %v1256 = vpop.f32.mrb[0].mxu0
      %1257 = vmatprep.mubr.f32.mxu0 0.0
      %1258 = vmatmul.mubr.f32.gmra.mrb[0].mxu0 %v970
      %v1259 = vpop.f32.mrb[0].mxu0
      %v1260 = vadd.f32 %v1115, %v1259
      %v1261 = vpop.f32.mrb[0].mxu0
      %1262 = vmatprep.mubr.f32.mxu0 0.0
      %1263 = vmatmul.mubr.f32.gmra.mrb[0].mxu0 %v975
      %v1264 = vpop.f32.mrb[0].mxu0
      %v1265 = vadd.f32 %v1120, %v1264
      %v1266 = vpop.f32.mrb[0].mxu0
      %1267 = vmatprep.mubr.f32.mxu0 0.0
      %1268 = vmatmul.mubr.f32.gmra.mrb[0].mxu0 %v980
      %v1269 = vpop.f32.mrb[0].mxu0
      %v1270 = vadd.f32 %v1125, %v1269
      %v1271 = vpop.f32.mrb[0].mxu0
      %1272 = vdwg.mxu0
      %v1273 = vlaneseq
      %v1274 = vshrl.u32 %v1273, 7
      %v1275 = vsub.s32 0, %v1274
      %v1276 = vrot.slane %v363, %v1275
      %v1277 = vadd.f32 %v1195, %v1276
      %v1278 = vadd.f32 %v1200, %v1276
      %v1279 = vadd.f32 %v1205, %v1276
      %v1280 = vadd.f32 %v1210, %v1276
      %v1281 = vadd.f32 %v1215, %v1276
      %v1282 = vadd.f32 %v1220, %v1276
      %v1283 = vadd.f32 %v1225, %v1276
      %v1284 = vadd.f32 %v1230, %v1276
      %v1285 = vadd.f32 %v1235, %v1276
      %v1286 = vadd.f32 %v1240, %v1276
      %v1287 = vadd.f32 %v1245, %v1276
      %v1288 = vadd.f32 %v1250, %v1276
      %v1289 = vadd.f32 %v1255, %v1276
      %v1290 = vadd.f32 %v1260, %v1276
      %v1291 = vadd.f32 %v1265, %v1276
      %v1292 = vadd.f32 %v1270, %v1276
      %v1293 = vmax.f32 %v1277, 0.0
      %v1294 = vmax.f32 %v1278, 0.0
      %v1295 = vmax.f32 %v1279, 0.0
      %v1296 = vmax.f32 %v1280, 0.0
      %v1297 = vmax.f32 %v1281, 0.0
      %v1298 = vmax.f32 %v1282, 0.0
      %v1299 = vmax.f32 %v1283, 0.0
      %v1300 = vmax.f32 %v1284, 0.0
      %v1301 = vmax.f32 %v1285, 0.0
      %v1302 = vmax.f32 %v1286, 0.0
      %v1303 = vmax.f32 %v1287, 0.0
      %v1304 = vmax.f32 %v1288, 0.0
      %v1305 = vmax.f32 %v1289, 0.0
      %v1306 = vmax.f32 %v1290, 0.0
      %v1307 = vmax.f32 %v1291, 0.0
      %v1308 = vmax.f32 %v1292, 0.0
      %v1309 = vlaneseq
      %v1310 = vshrl.u32 %v1309, 7
      %v1311 = vsub.s32 0, %v1310
      %v1312 = vrot.slane %v364, %v1311
      %1313 = vmatprep.subr.mxu0 0.0
      %1314 = vmatpush1.msra.mxu0 %v314
      %1315 = vmatprep.subr.mxu0 0.0
      %1316 = vmatpush1.msra.mxu0 %v315
      %1317 = vmatprep.subr.mxu0 0.0
      %1318 = vmatpush1.msra.mxu0 %v316
      %1319 = vmatprep.subr.mxu0 0.0
      %1320 = vmatpush1.msra.mxu0 %v317
      %1321 = vmatprep.subr.mxu0 0.0
      %1322 = vmatpush1.msra.mxu0 %v318
      %1323 = vmatprep.subr.mxu0 0.0
      %1324 = vmatpush1.msra.mxu0 %v319
      %1325 = vmatprep.subr.mxu0 0.0
      %1326 = vmatpush1.msra.mxu0 %v320
      %1327 = vmatprep.subr.mxu0 0.0
      %1328 = vmatpush1.msra.mxu0 %v321
      %1329 = vmatprep.subr.mxu0 0.0
      %1330 = vmatpush1.msra.mxu0 %v322
      %1331 = vmatprep.subr.mxu0 0.0
      %1332 = vmatpush1.msra.mxu0 %v323
      %1333 = vmatprep.subr.mxu0 0.0
      %1334 = vmatpush1.msra.mxu0 %v324
      %1335 = vmatprep.subr.mxu0 0.0
      %1336 = vmatpush1.msra.mxu0 %v325
      %1337 = vmatprep.subr.mxu0 0.0
      %1338 = vmatpush1.msra.mxu0 %v326
      %1339 = vmatprep.subr.mxu0 0.0
      %1340 = vmatpush1.msra.mxu0 %v327
      %1341 = vmatprep.subr.mxu0 0.0
      %1342 = vmatpush1.msra.mxu0 %v328
      %1343 = vmatprep.subr.mxu0 0.0
      %1344 = vmatpush1.msra.mxu0 %v329
      %1345 = vmatprep.subr.mxu0 0.0
      %1346 = vmatpush1.msra.mxu0 0.0
      %1347 = vmatprep.subr.mxu0 0.0
      %1348 = vmatpush1.msra.mxu0 0.0
      %1349 = vmatprep.subr.mxu0 0.0
      %1350 = vmatpush1.msra.mxu0 0.0
      %1351 = vmatprep.subr.mxu0 0.0
      %1352 = vmatpush1.msra.mxu0 0.0
      %1353 = vmatprep.subr.mxu0 0.0
      %1354 = vmatpush1.msra.mxu0 0.0
      %1355 = vmatprep.subr.mxu0 0.0
      %1356 = vmatpush1.msra.mxu0 0.0
      %1357 = vmatprep.subr.mxu0 0.0
      %1358 = vmatpush1.msra.mxu0 0.0
      %1359 = vmatprep.subr.mxu0 0.0
      %1360 = vmatpush1.msra.mxu0 0.0
      %1361 = vmatprep.subr.mxu0 0.0
      %1362 = vmatpush1.msra.mxu0 0.0
      %1363 = vmatprep.subr.mxu0 0.0
      %1364 = vmatpush1.msra.mxu0 0.0
      %1365 = vmatprep.subr.mxu0 0.0
      %1366 = vmatpush1.msra.mxu0 0.0
      %1367 = vmatprep.subr.mxu0 0.0
      %1368 = vmatpush1.msra.mxu0 0.0
      %1369 = vmatprep.subr.mxu0 0.0
      %1370 = vmatpush1.msra.mxu0 0.0
      %1371 = vmatprep.subr.mxu0 0.0
      %1372 = vmatpush1.msra.mxu0 0.0
      %1373 = vmatprep.subr.mxu0 0.0
      %1374 = vmatpush1.msra.mxu0 0.0
      %1375 = vmatprep.subr.mxu0 0.0
      %1376 = vmatpush1.msra.mxu0 0.0
      %1377 = vmatprep.mubr.f32.mxu0 0.0
      %1378 = vmatmul.mubr.f32.gmra.mrb[0].mxu0 %v1293
      %v1379 = vpop.f32.mrb[0].mxu0
      %v1380 = vadd.f32 %v1312, %v1379
      %v1381 = vpop.f32.mrb[0].mxu0
      %1382 = vmatprep.mubr.f32.mxu0 0.0
      %1383 = vmatmul.mubr.f32.gmra.mrb[0].mxu0 %v1294
      %v1384 = vpop.f32.mrb[0].mxu0
      %v1385 = vadd.f32 %v1312, %v1384
      %v1386 = vpop.f32.mrb[0].mxu0
      %1387 = vmatprep.mubr.f32.mxu0 0.0
      %1388 = vmatmul.mubr.f32.gmra.mrb[0].mxu0 %v1295
      %v1389 = vpop.f32.mrb[0].mxu0
      %v1390 = vadd.f32 %v1312, %v1389
      %v1391 = vpop.f32.mrb[0].mxu0
      %1392 = vmatprep.mubr.f32.mxu0 0.0
      %1393 = vmatmul.mubr.f32.gmra.mrb[0].mxu0 %v1296
      %v1394 = vpop.f32.mrb[0].mxu0
      %v1395 = vadd.f32 %v1312, %v1394
      %v1396 = vpop.f32.mrb[0].mxu0
      %1397 = vmatprep.mubr.f32.mxu0 0.0
      %1398 = vmatmul.mubr.f32.gmra.mrb[0].mxu0 %v1297
      %v1399 = vpop.f32.mrb[0].mxu0
      %v1400 = vadd.f32 %v1312, %v1399
      %v1401 = vpop.f32.mrb[0].mxu0
      %1402 = vmatprep.mubr.f32.mxu0 0.0
      %1403 = vmatmul.mubr.f32.gmra.mrb[0].mxu0 %v1298
      %v1404 = vpop.f32.mrb[0].mxu0
      %v1405 = vadd.f32 %v1312, %v1404
      %v1406 = vpop.f32.mrb[0].mxu0
      %1407 = vmatprep.mubr.f32.mxu0 0.0
      %1408 = vmatmul.mubr.f32.gmra.mrb[0].mxu0 %v1299
      %v1409 = vpop.f32.mrb[0].mxu0
      %v1410 = vadd.f32 %v1312, %v1409
      %v1411 = vpop.f32.mrb[0].mxu0
      %1412 = vmatprep.mubr.f32.mxu0 0.0
      %1413 = vmatmul.mubr.f32.gmra.mrb[0].mxu0 %v1300
      %v1414 = vpop.f32.mrb[0].mxu0
      %v1415 = vadd.f32 %v1312, %v1414
      %v1416 = vpop.f32.mrb[0].mxu0
      %1417 = vmatprep.mubr.f32.mxu0 0.0
      %1418 = vmatmul.mubr.f32.gmra.mrb[0].mxu0 %v1301
      %v1419 = vpop.f32.mrb[0].mxu0
      %v1420 = vadd.f32 %v1312, %v1419
      %v1421 = vpop.f32.mrb[0].mxu0
      %1422 = vmatprep.mubr.f32.mxu0 0.0
      %1423 = vmatmul.mubr.f32.gmra.mrb[0].mxu0 %v1302
      %v1424 = vpop.f32.mrb[0].mxu0
      %v1425 = vadd.f32 %v1312, %v1424
      %v1426 = vpop.f32.mrb[0].mxu0
      %1427 = vmatprep.mubr.f32.mxu0 0.0
      %1428 = vmatmul.mubr.f32.gmra.mrb[0].mxu0 %v1303
      %v1429 = vpop.f32.mrb[0].mxu0
      %v1430 = vadd.f32 %v1312, %v1429
      %v1431 = vpop.f32.mrb[0].mxu0
      %1432 = vmatprep.mubr.f32.mxu0 0.0
      %1433 = vmatmul.mubr.f32.gmra.mrb[0].mxu0 %v1304
      %v1434 = vpop.f32.mrb[0].mxu0
      %v1435 = vadd.f32 %v1312, %v1434
      %v1436 = vpop.f32.mrb[0].mxu0
      %1437 = vmatprep.mubr.f32.mxu0 0.0
      %1438 = vmatmul.mubr.f32.gmra.mrb[0].mxu0 %v1305
      %v1439 = vpop.f32.mrb[0].mxu0
      %v1440 = vadd.f32 %v1312, %v1439
      %v1441 = vpop.f32.mrb[0].mxu0
      %1442 = vmatprep.mubr.f32.mxu0 0.0
      %1443 = vmatmul.mubr.f32.gmra.mrb[0].mxu0 %v1306
      %v1444 = vpop.f32.mrb[0].mxu0
      %v1445 = vadd.f32 %v1312, %v1444
      %v1446 = vpop.f32.mrb[0].mxu0
      %1447 = vmatprep.mubr.f32.mxu0 0.0
      %1448 = vmatmul.mubr.f32.gmra.mrb[0].mxu0 %v1307
      %v1449 = vpop.f32.mrb[0].mxu0
      %v1450 = vadd.f32 %v1312, %v1449
      %v1451 = vpop.f32.mrb[0].mxu0
      %1452 = vmatprep.mubr.f32.mxu0 0.0
      %1453 = vmatmul.mubr.f32.gmra.mrb[0].mxu0 %v1308
      %v1454 = vpop.f32.mrb[0].mxu0
      %v1455 = vadd.f32 %v1312, %v1454
      %v1456 = vpop.f32.mrb[0].mxu0
      %1457 = vdwg.mxu0
      %v1458 = vmax.f32 %v1380, 0.0
      %v1459 = vmax.f32 %v1385, 0.0
      %v1460 = vmax.f32 %v1390, 0.0
      %v1461 = vmax.f32 %v1395, 0.0
      %v1462 = vmax.f32 %v1400, 0.0
      %v1463 = vmax.f32 %v1405, 0.0
      %v1464 = vmax.f32 %v1410, 0.0
      %v1465 = vmax.f32 %v1415, 0.0
      %v1466 = vmax.f32 %v1420, 0.0
      %v1467 = vmax.f32 %v1425, 0.0
      %v1468 = vmax.f32 %v1430, 0.0
      %v1469 = vmax.f32 %v1435, 0.0
      %v1470 = vmax.f32 %v1440, 0.0
      %v1471 = vmax.f32 %v1445, 0.0
      %v1472 = vmax.f32 %v1450, 0.0
      %v1473 = vmax.f32 %v1455, 0.0
      %v1474 = vlaneseq
      %v1475 = vshrl.u32 %v1474, 7
      %v1476 = vsub.s32 0, %v1475
      %v1477 = vrot.slane %v365, %v1476
      %1478 = vmatprep.subr.mxu0 0.0
      %1479 = vmatpush1.msra.mxu0 %v330
      %1480 = vmatprep.subr.mxu0 0.0
      %1481 = vmatpush1.msra.mxu0 %v331
      %1482 = vmatprep.subr.mxu0 0.0
      %1483 = vmatpush1.msra.mxu0 %v332
      %1484 = vmatprep.subr.mxu0 0.0
      %1485 = vmatpush1.msra.mxu0 %v333
      %1486 = vmatprep.subr.mxu0 0.0
      %1487 = vmatpush1.msra.mxu0 %v334
      %1488 = vmatprep.subr.mxu0 0.0
      %1489 = vmatpush1.msra.mxu0 %v335
      %1490 = vmatprep.subr.mxu0 0.0
      %1491 = vmatpush1.msra.mxu0 %v336
      %1492 = vmatprep.subr.mxu0 0.0
      %1493 = vmatpush1.msra.mxu0 %v337
      %1494 = vmatprep.subr.mxu0 0.0
      %1495 = vmatpush1.msra.mxu0 %v338
      %1496 = vmatprep.subr.mxu0 0.0
      %1497 = vmatpush1.msra.mxu0 %v339
      %1498 = vmatprep.subr.mxu0 0.0
      %1499 = vmatpush1.msra.mxu0 %v340
      %1500 = vmatprep.subr.mxu0 0.0
      %1501 = vmatpush1.msra.mxu0 %v341
      %1502 = vmatprep.subr.mxu0 0.0
      %1503 = vmatpush1.msra.mxu0 %v342
      %1504 = vmatprep.subr.mxu0 0.0
      %1505 = vmatpush1.msra.mxu0 %v343
      %1506 = vmatprep.subr.mxu0 0.0
      %1507 = vmatpush1.msra.mxu0 %v344
      %1508 = vmatprep.subr.mxu0 0.0
      %1509 = vmatpush1.msra.mxu0 %v345
      %1510 = vmatprep.subr.mxu0 0.0
      %1511 = vmatpush1.msra.mxu0 0.0
      %1512 = vmatprep.subr.mxu0 0.0
      %1513 = vmatpush1.msra.mxu0 0.0
      %1514 = vmatprep.subr.mxu0 0.0
      %1515 = vmatpush1.msra.mxu0 0.0
      %1516 = vmatprep.subr.mxu0 0.0
      %1517 = vmatpush1.msra.mxu0 0.0
      %1518 = vmatprep.subr.mxu0 0.0
      %1519 = vmatpush1.msra.mxu0 0.0
      %1520 = vmatprep.subr.mxu0 0.0
      %1521 = vmatpush1.msra.mxu0 0.0
      %1522 = vmatprep.subr.mxu0 0.0
      %1523 = vmatpush1.msra.mxu0 0.0
      %1524 = vmatprep.subr.mxu0 0.0
      %1525 = vmatpush1.msra.mxu0 0.0
      %1526 = vmatprep.subr.mxu0 0.0
      %1527 = vmatpush1.msra.mxu0 0.0
      %1528 = vmatprep.subr.mxu0 0.0
      %1529 = vmatpush1.msra.mxu0 0.0
      %1530 = vmatprep.subr.mxu0 0.0
      %1531 = vmatpush1.msra.mxu0 0.0
      %1532 = vmatprep.subr.mxu0 0.0
      %1533 = vmatpush1.msra.mxu0 0.0
      %1534 = vmatprep.subr.mxu0 0.0
      %1535 = vmatpush1.msra.mxu0 0.0
      %1536 = vmatprep.subr.mxu0 0.0
      %1537 = vmatpush1.msra.mxu0 0.0
      %1538 = vmatprep.subr.mxu0 0.0
      %1539 = vmatpush1.msra.mxu0 0.0
      %1540 = vmatprep.subr.mxu0 0.0
      %1541 = vmatpush1.msra.mxu0 0.0
      %1542 = vmatprep.mubr.f32.mxu0 0.0
      %1543 = vmatmul.mubr.f32.gmra.mrb[0].mxu0 %v1458
      %v1544 = vpop.f32.mrb[0].mxu0
      %v1545 = vadd.f32 %v1477, %v1544
      %v1546 = vpop.f32.mrb[0].mxu0
      %1547 = vmatprep.mubr.f32.mxu0 0.0
      %1548 = vmatmul.mubr.f32.gmra.mrb[0].mxu0 %v1459
      %v1549 = vpop.f32.mrb[0].mxu0
      %v1550 = vadd.f32 %v1477, %v1549
      %v1551 = vpop.f32.mrb[0].mxu0
      %1552 = vmatprep.mubr.f32.mxu0 0.0
      %1553 = vmatmul.mubr.f32.gmra.mrb[0].mxu0 %v1460
      %v1554 = vpop.f32.mrb[0].mxu0
      %v1555 = vadd.f32 %v1477, %v1554
      %v1556 = vpop.f32.mrb[0].mxu0
      %1557 = vmatprep.mubr.f32.mxu0 0.0
      %1558 = vmatmul.mubr.f32.gmra.mrb[0].mxu0 %v1461
      %v1559 = vpop.f32.mrb[0].mxu0
      %v1560 = vadd.f32 %v1477, %v1559
      %v1561 = vpop.f32.mrb[0].mxu0
      %1562 = vmatprep.mubr.f32.mxu0 0.0
      %1563 = vmatmul.mubr.f32.gmra.mrb[0].mxu0 %v1462
      %v1564 = vpop.f32.mrb[0].mxu0
      %v1565 = vadd.f32 %v1477, %v1564
      %v1566 = vpop.f32.mrb[0].mxu0
      %1567 = vmatprep.mubr.f32.mxu0 0.0
      %1568 = vmatmul.mubr.f32.gmra.mrb[0].mxu0 %v1463
      %v1569 = vpop.f32.mrb[0].mxu0
      %v1570 = vadd.f32 %v1477, %v1569
      %v1571 = vpop.f32.mrb[0].mxu0
      %1572 = vmatprep.mubr.f32.mxu0 0.0
      %1573 = vmatmul.mubr.f32.gmra.mrb[0].mxu0 %v1464
      %v1574 = vpop.f32.mrb[0].mxu0
      %v1575 = vadd.f32 %v1477, %v1574
      %v1576 = vpop.f32.mrb[0].mxu0
      %1577 = vmatprep.mubr.f32.mxu0 0.0
      %1578 = vmatmul.mubr.f32.gmra.mrb[0].mxu0 %v1465
      %v1579 = vpop.f32.mrb[0].mxu0
      %v1580 = vadd.f32 %v1477, %v1579
      %v1581 = vpop.f32.mrb[0].mxu0
      %1582 = vmatprep.mubr.f32.mxu0 0.0
      %1583 = vmatmul.mubr.f32.gmra.mrb[0].mxu0 %v1466
      %v1584 = vpop.f32.mrb[0].mxu0
      %v1585 = vadd.f32 %v1477, %v1584
      %v1586 = vpop.f32.mrb[0].mxu0
      %1587 = vmatprep.mubr.f32.mxu0 0.0
      %1588 = vmatmul.mubr.f32.gmra.mrb[0].mxu0 %v1467
      %v1589 = vpop.f32.mrb[0].mxu0
      %v1590 = vadd.f32 %v1477, %v1589
      %v1591 = vpop.f32.mrb[0].mxu0
      %1592 = vmatprep.mubr.f32.mxu0 0.0
      %1593 = vmatmul.mubr.f32.gmra.mrb[0].mxu0 %v1468
      %v1594 = vpop.f32.mrb[0].mxu0
      %v1595 = vadd.f32 %v1477, %v1594
      %v1596 = vpop.f32.mrb[0].mxu0
      %1597 = vmatprep.mubr.f32.mxu0 0.0
      %1598 = vmatmul.mubr.f32.gmra.mrb[0].mxu0 %v1469
      %v1599 = vpop.f32.mrb[0].mxu0
      %v1600 = vadd.f32 %v1477, %v1599
      %v1601 = vpop.f32.mrb[0].mxu0
      %1602 = vmatprep.mubr.f32.mxu0 0.0
      %1603 = vmatmul.mubr.f32.gmra.mrb[0].mxu0 %v1470
      %v1604 = vpop.f32.mrb[0].mxu0
      %v1605 = vadd.f32 %v1477, %v1604
      %v1606 = vpop.f32.mrb[0].mxu0
      %1607 = vmatprep.mubr.f32.mxu0 0.0
      %1608 = vmatmul.mubr.f32.gmra.mrb[0].mxu0 %v1471
      %v1609 = vpop.f32.mrb[0].mxu0
      %v1610 = vadd.f32 %v1477, %v1609
      %v1611 = vpop.f32.mrb[0].mxu0
      %1612 = vmatprep.mubr.f32.mxu0 0.0
      %1613 = vmatmul.mubr.f32.gmra.mrb[0].mxu0 %v1472
      %v1614 = vpop.f32.mrb[0].mxu0
      %v1615 = vadd.f32 %v1477, %v1614
      %v1616 = vpop.f32.mrb[0].mxu0
      %1617 = vmatprep.mubr.f32.mxu0 0.0
      %1618 = vmatmul.mubr.f32.gmra.mrb[0].mxu0 %v1473
      %v1619 = vpop.f32.mrb[0].mxu0
      %v1620 = vadd.f32 %v1477, %v1619
      %v1621 = vpop.f32.mrb[0].mxu0
      %1622 = vdwg.mxu0
      %v1623 = vmax.f32 %v1545, 0.0
      %v1624 = vmax.f32 %v1550, 0.0
      %v1625 = vmax.f32 %v1555, 0.0
      %v1626 = vmax.f32 %v1560, 0.0
      %v1627 = vmax.f32 %v1565, 0.0
      %v1628 = vmax.f32 %v1570, 0.0
      %v1629 = vmax.f32 %v1575, 0.0
      %v1630 = vmax.f32 %v1580, 0.0
      %v1631 = vmax.f32 %v1585, 0.0
      %v1632 = vmax.f32 %v1590, 0.0
      %v1633 = vmax.f32 %v1595, 0.0
      %v1634 = vmax.f32 %v1600, 0.0
      %v1635 = vmax.f32 %v1605, 0.0
      %v1636 = vmax.f32 %v1610, 0.0
      %v1637 = vmax.f32 %v1615, 0.0
      %v1638 = vmax.f32 %v1620, 0.0
      %v1639 = vlaneseq
      %v1640 = vshrl.u32 %v1639, 7
      %v1641 = vsub.s32 0, %v1640
      %v1642 = vrot.slane %v366, %v1641
      %1643 = vmatprep.subr.mxu0 0.0
      %1644 = vmatpush1.msra.mxu0 %v346
      %1645 = vmatprep.subr.mxu0 0.0
      %1646 = vmatpush1.msra.mxu0 %v347
      %1647 = vmatprep.subr.mxu0 0.0
      %1648 = vmatpush1.msra.mxu0 %v348
      %1649 = vmatprep.subr.mxu0 0.0
      %1650 = vmatpush1.msra.mxu0 %v349
      %1651 = vmatprep.subr.mxu0 0.0
      %1652 = vmatpush1.msra.mxu0 %v350
      %1653 = vmatprep.subr.mxu0 0.0
      %1654 = vmatpush1.msra.mxu0 %v351
      %1655 = vmatprep.subr.mxu0 0.0
      %1656 = vmatpush1.msra.mxu0 %v352
      %1657 = vmatprep.subr.mxu0 0.0
      %1658 = vmatpush1.msra.mxu0 %v353
      %1659 = vmatprep.subr.mxu0 0.0
      %1660 = vmatpush1.msra.mxu0 %v354
      %1661 = vmatprep.subr.mxu0 0.0
      %1662 = vmatpush1.msra.mxu0 %v355
      %1663 = vmatprep.subr.mxu0 0.0
      %1664 = vmatpush1.msra.mxu0 %v356
      %1665 = vmatprep.subr.mxu0 0.0
      %1666 = vmatpush1.msra.mxu0 %v357
      %1667 = vmatprep.subr.mxu0 0.0
      %1668 = vmatpush1.msra.mxu0 %v358
      %1669 = vmatprep.subr.mxu0 0.0
      %1670 = vmatpush1.msra.mxu0 %v359
      %1671 = vmatprep.subr.mxu0 0.0
      %1672 = vmatpush1.msra.mxu0 %v360
      %1673 = vmatprep.subr.mxu0 0.0
      %1674 = vmatpush1.msra.mxu0 %v361
      %1675 = vmatprep.subr.mxu0 0.0
      %1676 = vmatpush1.msra.mxu0 0.0
      %1677 = vmatprep.subr.mxu0 0.0
      %1678 = vmatpush1.msra.mxu0 0.0
      %1679 = vmatprep.subr.mxu0 0.0
      %1680 = vmatpush1.msra.mxu0 0.0
      %1681 = vmatprep.subr.mxu0 0.0
      %1682 = vmatpush1.msra.mxu0 0.0
      %1683 = vmatprep.subr.mxu0 0.0
      %1684 = vmatpush1.msra.mxu0 0.0
      %1685 = vmatprep.subr.mxu0 0.0
      %1686 = vmatpush1.msra.mxu0 0.0
      %1687 = vmatprep.subr.mxu0 0.0
      %1688 = vmatpush1.msra.mxu0 0.0
      %1689 = vmatprep.subr.mxu0 0.0
      %1690 = vmatpush1.msra.mxu0 0.0
      %1691 = vmatprep.subr.mxu0 0.0
      %1692 = vmatpush1.msra.mxu0 0.0
      %1693 = vmatprep.subr.mxu0 0.0
      %1694 = vmatpush1.msra.mxu0 0.0
      %1695 = vmatprep.subr.mxu0 0.0
      %1696 = vmatpush1.msra.mxu0 0.0
      %1697 = vmatprep.subr.mxu0 0.0
      %1698 = vmatpush1.msra.mxu0 0.0
      %1699 = vmatprep.subr.mxu0 0.0
      %1700 = vmatpush1.msra.mxu0 0.0
      %1701 = vmatprep.subr.mxu0 0.0
      %1702 = vmatpush1.msra.mxu0 0.0
      %1703 = vmatprep.subr.mxu0 0.0
      %1704 = vmatpush1.msra.mxu0 0.0
      %1705 = vmatprep.subr.mxu0 0.0
      %1706 = vmatpush1.msra.mxu0 0.0
      %1707 = vmatprep.mubr.f32.mxu0 0.0
      %1708 = vmatmul.mubr.f32.gmra.mrb[0].mxu0 %v1623
      %v1709 = vpop.f32.mrb[0].mxu0
      %v1710 = vadd.f32 %v1642, %v1709
      %v1711 = vpop.f32.mrb[0].mxu0
      %1712 = vmatprep.mubr.f32.mxu0 0.0
      %1713 = vmatmul.mubr.f32.gmra.mrb[0].mxu0 %v1624
      %v1714 = vpop.f32.mrb[0].mxu0
      %v1715 = vadd.f32 %v1642, %v1714
      %v1716 = vpop.f32.mrb[0].mxu0
      %1717 = vmatprep.mubr.f32.mxu0 0.0
      %1718 = vmatmul.mubr.f32.gmra.mrb[0].mxu0 %v1625
      %v1719 = vpop.f32.mrb[0].mxu0
      %v1720 = vadd.f32 %v1642, %v1719
      %v1721 = vpop.f32.mrb[0].mxu0
      %1722 = vmatprep.mubr.f32.mxu0 0.0
      %1723 = vmatmul.mubr.f32.gmra.mrb[0].mxu0 %v1626
      %v1724 = vpop.f32.mrb[0].mxu0
      %v1725 = vadd.f32 %v1642, %v1724
      %v1726 = vpop.f32.mrb[0].mxu0
      %1727 = vmatprep.mubr.f32.mxu0 0.0
      %1728 = vmatmul.mubr.f32.gmra.mrb[0].mxu0 %v1627
      %v1729 = vpop.f32.mrb[0].mxu0
      %v1730 = vadd.f32 %v1642, %v1729
      %v1731 = vpop.f32.mrb[0].mxu0
      %1732 = vmatprep.mubr.f32.mxu0 0.0
      %1733 = vmatmul.mubr.f32.gmra.mrb[0].mxu0 %v1628
      %v1734 = vpop.f32.mrb[0].mxu0
      %v1735 = vadd.f32 %v1642, %v1734
      %v1736 = vpop.f32.mrb[0].mxu0
      %1737 = vmatprep.mubr.f32.mxu0 0.0
      %1738 = vmatmul.mubr.f32.gmra.mrb[0].mxu0 %v1629
      %v1739 = vpop.f32.mrb[0].mxu0
      %v1740 = vadd.f32 %v1642, %v1739
      %v1741 = vpop.f32.mrb[0].mxu0
      %1742 = vmatprep.mubr.f32.mxu0 0.0
      %1743 = vmatmul.mubr.f32.gmra.mrb[0].mxu0 %v1630
      %v1744 = vpop.f32.mrb[0].mxu0
      %v1745 = vadd.f32 %v1642, %v1744
      %v1746 = vpop.f32.mrb[0].mxu0
      %1747 = vmatprep.mubr.f32.mxu0 0.0
      %1748 = vmatmul.mubr.f32.gmra.mrb[0].mxu0 %v1631
      %v1749 = vpop.f32.mrb[0].mxu0
      %v1750 = vadd.f32 %v1642, %v1749
      %v1751 = vpop.f32.mrb[0].mxu0
      %1752 = vmatprep.mubr.f32.mxu0 0.0
      %1753 = vmatmul.mubr.f32.gmra.mrb[0].mxu0 %v1632
      %v1754 = vpop.f32.mrb[0].mxu0
      %v1755 = vadd.f32 %v1642, %v1754
      %v1756 = vpop.f32.mrb[0].mxu0
      %1757 = vmatprep.mubr.f32.mxu0 0.0
      %1758 = vmatmul.mubr.f32.gmra.mrb[0].mxu0 %v1633
      %v1759 = vpop.f32.mrb[0].mxu0
      %v1760 = vadd.f32 %v1642, %v1759
      %v1761 = vpop.f32.mrb[0].mxu0
      %1762 = vmatprep.mubr.f32.mxu0 0.0
      %1763 = vmatmul.mubr.f32.gmra.mrb[0].mxu0 %v1634
      %v1764 = vpop.f32.mrb[0].mxu0
      %v1765 = vadd.f32 %v1642, %v1764
      %v1766 = vpop.f32.mrb[0].mxu0
      %1767 = vmatprep.mubr.f32.mxu0 0.0
      %1768 = vmatmul.mubr.f32.gmra.mrb[0].mxu0 %v1635
      %v1769 = vpop.f32.mrb[0].mxu0
      %v1770 = vadd.f32 %v1642, %v1769
      %v1771 = vpop.f32.mrb[0].mxu0
      %1772 = vmatprep.mubr.f32.mxu0 0.0
      %1773 = vmatmul.mubr.f32.gmra.mrb[0].mxu0 %v1636
      %v1774 = vpop.f32.mrb[0].mxu0
      %v1775 = vadd.f32 %v1642, %v1774
      %v1776 = vpop.f32.mrb[0].mxu0
      %1777 = vmatprep.mubr.f32.mxu0 0.0
      %1778 = vmatmul.mubr.f32.gmra.mrb[0].mxu0 %v1637
      %v1779 = vpop.f32.mrb[0].mxu0
      %v1780 = vadd.f32 %v1642, %v1779
      %v1781 = vpop.f32.mrb[0].mxu0
      %1782 = vmatprep.mubr.f32.mxu0 0.0
      %1783 = vmatmul.mubr.f32.gmra.mrb[0].mxu0 %v1638
      %v1784 = vpop.f32.mrb[0].mxu0
      %v1785 = vadd.f32 %v1642, %v1784
      %v1786 = vpop.f32.mrb[0].mxu0
      %1787 = vdwg.mxu0
      %1788 = vmax.xlane.f32.xlu0 %v1710
      %v1789 = vpop.xlane.xlu0 %1788
      %1790 = vmax.xlane.f32.xlu0 %v1715
      %v1791 = vpop.xlane.xlu0 %1790
      %1792 = vmax.xlane.f32.xlu0 %v1720
      %v1793 = vpop.xlane.xlu0 %1792
      %1794 = vmax.xlane.f32.xlu0 %v1725
      %v1795 = vpop.xlane.xlu0 %1794
      %1796 = vmax.xlane.f32.xlu0 %v1730
      %v1797 = vpop.xlane.xlu0 %1796
      %1798 = vmax.xlane.f32.xlu0 %v1735
      %v1799 = vpop.xlane.xlu0 %1798
      %1800 = vmax.xlane.f32.xlu0 %v1740
      %v1801 = vpop.xlane.xlu0 %1800
      %1802 = vmax.xlane.f32.xlu0 %v1745
      %v1803 = vpop.xlane.xlu0 %1802
      %1804 = vmax.xlane.f32.xlu0 %v1750
      %v1805 = vpop.xlane.xlu0 %1804
      %1806 = vmax.xlane.f32.xlu0 %v1755
      %v1807 = vpop.xlane.xlu0 %1806
      %1808 = vmax.xlane.f32.xlu0 %v1760
      %v1809 = vpop.xlane.xlu0 %1808
      %1810 = vmax.xlane.f32.xlu0 %v1765
      %v1811 = vpop.xlane.xlu0 %1810
      %1812 = vmax.xlane.f32.xlu0 %v1770
      %v1813 = vpop.xlane.xlu0 %1812
      %1814 = vmax.xlane.f32.xlu0 %v1775
      %v1815 = vpop.xlane.xlu0 %1814
      %1816 = vmax.xlane.f32.xlu0 %v1780
      %v1817 = vpop.xlane.xlu0 %1816
      %1818 = vmax.xlane.f32.xlu0 %v1785
      %v1819 = vpop.xlane.xlu0 %1818
      %v1820 = vsub.f32 %v1710, %v1789
      %v1821 = vsub.f32 %v1715, %v1791
      %v1822 = vsub.f32 %v1720, %v1793
      %v1823 = vsub.f32 %v1725, %v1795
      %v1824 = vsub.f32 %v1730, %v1797
      %v1825 = vsub.f32 %v1735, %v1799
      %v1826 = vsub.f32 %v1740, %v1801
      %v1827 = vsub.f32 %v1745, %v1803
      %v1828 = vsub.f32 %v1750, %v1805
      %v1829 = vsub.f32 %v1755, %v1807
      %v1830 = vsub.f32 %v1760, %v1809
      %v1831 = vsub.f32 %v1765, %v1811
      %v1832 = vsub.f32 %v1770, %v1813
      %v1833 = vsub.f32 %v1775, %v1815
      %v1834 = vsub.f32 %v1780, %v1817
      %v1835 = vsub.f32 %v1785, %v1819
      %v1836 = vmul.f32 %v1820, 1.442695
      %v1837 = vpow.pop %v1836
      %v1838 = vmul.f32 %v1821, 1.442695
      %v1839 = vpow.pop %v1838
      %v1840 = vmul.f32 %v1822, 1.442695
      %v1841 = vpow.pop %v1840
      %v1842 = vmul.f32 %v1823, 1.442695
      %v1843 = vpow.pop %v1842
      %v1844 = vmul.f32 %v1824, 1.442695
      %v1845 = vpow.pop %v1844
      %v1846 = vmul.f32 %v1825, 1.442695
      %v1847 = vpow.pop %v1846
      %v1848 = vmul.f32 %v1826, 1.442695
      %v1849 = vpow.pop %v1848
      %v1850 = vmul.f32 %v1827, 1.442695
      %v1851 = vpow.pop %v1850
      %v1852 = vmul.f32 %v1828, 1.442695
      %v1853 = vpow.pop %v1852
      %v1854 = vmul.f32 %v1829, 1.442695
      %v1855 = vpow.pop %v1854
      %v1856 = vmul.f32 %v1830, 1.442695
      %v1857 = vpow.pop %v1856
      %v1858 = vmul.f32 %v1831, 1.442695
      %v1859 = vpow.pop %v1858
      %v1860 = vmul.f32 %v1832, 1.442695
      %v1861 = vpow.pop %v1860
      %v1862 = vmul.f32 %v1833, 1.442695
      %v1863 = vpow.pop %v1862
      %v1864 = vmul.f32 %v1834, 1.442695
      %v1865 = vpow.pop %v1864
      %v1866 = vmul.f32 %v1835, 1.442695
      %v1867 = vpow.pop %v1866
      %1868 = vadd.xlane.f32.xlu0 %v1837
      %v1869 = vpop.xlane.xlu0 %1868
      %1870 = vadd.xlane.f32.xlu0 %v1839
      %v1871 = vpop.xlane.xlu0 %1870
      %1872 = vadd.xlane.f32.xlu0 %v1841
      %v1873 = vpop.xlane.xlu0 %1872
      %1874 = vadd.xlane.f32.xlu0 %v1843
      %v1875 = vpop.xlane.xlu0 %1874
      %1876 = vadd.xlane.f32.xlu0 %v1845
      %v1877 = vpop.xlane.xlu0 %1876
      %1878 = vadd.xlane.f32.xlu0 %v1847
      %v1879 = vpop.xlane.xlu0 %1878
      %1880 = vadd.xlane.f32.xlu0 %v1849
      %v1881 = vpop.xlane.xlu0 %1880
      %1882 = vadd.xlane.f32.xlu0 %v1851
      %v1883 = vpop.xlane.xlu0 %1882
      %1884 = vadd.xlane.f32.xlu0 %v1853
      %v1885 = vpop.xlane.xlu0 %1884
      %1886 = vadd.xlane.f32.xlu0 %v1855
      %v1887 = vpop.xlane.xlu0 %1886
      %1888 = vadd.xlane.f32.xlu0 %v1857
      %v1889 = vpop.xlane.xlu0 %1888
      %1890 = vadd.xlane.f32.xlu0 %v1859
      %v1891 = vpop.xlane.xlu0 %1890
      %1892 = vadd.xlane.f32.xlu0 %v1861
      %v1893 = vpop.xlane.xlu0 %1892
      %1894 = vadd.xlane.f32.xlu0 %v1863
      %v1895 = vpop.xlane.xlu0 %1894
      %1896 = vadd.xlane.f32.xlu0 %v1865
      %v1897 = vpop.xlane.xlu0 %1896
      %1898 = vadd.xlane.f32.xlu0 %v1867
      %v1899 = vpop.xlane.xlu0 %1898
      %v1900 = vlog2.pop %v1869
      %v1901 = vmul.f32 %v1900, 0.6931472
      %v1902 = vlog2.pop %v1871
      %v1903 = vmul.f32 %v1902, 0.6931472
      %v1904 = vlog2.pop %v1873
      %v1905 = vmul.f32 %v1904, 0.6931472
      %v1906 = vlog2.pop %v1875
      %v1907 = vmul.f32 %v1906, 0.6931472
      %v1908 = vlog2.pop %v1877
      %v1909 = vmul.f32 %v1908, 0.6931472
      %v1910 = vlog2.pop %v1879
      %v1911 = vmul.f32 %v1910, 0.6931472
      %v1912 = vlog2.pop %v1881
      %v1913 = vmul.f32 %v1912, 0.6931472
      %v1914 = vlog2.pop %v1883
      %v1915 = vmul.f32 %v1914, 0.6931472
      %v1916 = vlog2.pop %v1885
      %v1917 = vmul.f32 %v1916, 0.6931472
      %v1918 = vlog2.pop %v1887
      %v1919 = vmul.f32 %v1918, 0.6931472
      %v1920 = vlog2.pop %v1889
      %v1921 = vmul.f32 %v1920, 0.6931472
      %v1922 = vlog2.pop %v1891
      %v1923 = vmul.f32 %v1922, 0.6931472
      %v1924 = vlog2.pop %v1893
      %v1925 = vmul.f32 %v1924, 0.6931472
      %v1926 = vlog2.pop %v1895
      %v1927 = vmul.f32 %v1926, 0.6931472
      %v1928 = vlog2.pop %v1897
      %v1929 = vmul.f32 %v1928, 0.6931472
      %v1930 = vlog2.pop %v1899
      %v1931 = vmul.f32 %v1930, 0.6931472
      %v1932 = vadd.f32 %v1789, %v1901
      %v1933 = vadd.f32 %v1791, %v1903
      %v1934 = vadd.f32 %v1793, %v1905
      %v1935 = vadd.f32 %v1795, %v1907
      %v1936 = vadd.f32 %v1797, %v1909
      %v1937 = vadd.f32 %v1799, %v1911
      %v1938 = vadd.f32 %v1801, %v1913
      %v1939 = vadd.f32 %v1803, %v1915
      %v1940 = vadd.f32 %v1805, %v1917
      %v1941 = vadd.f32 %v1807, %v1919
      %v1942 = vadd.f32 %v1809, %v1921
      %v1943 = vadd.f32 %v1811, %v1923
      %v1944 = vadd.f32 %v1813, %v1925
      %v1945 = vadd.f32 %v1815, %v1927
      %v1946 = vadd.f32 %v1817, %v1929
      %v1947 = vadd.f32 %v1819, %v1931
      %v1948 = vsub.f32 %v1710, %v1932
      %v1949 = vsub.f32 %v1715, %v1933
      %v1950 = vsub.f32 %v1720, %v1934
      %v1951 = vsub.f32 %v1725, %v1935
      %v1952 = vsub.f32 %v1730, %v1936
      %v1953 = vsub.f32 %v1735, %v1937
      %v1954 = vsub.f32 %v1740, %v1938
      %v1955 = vsub.f32 %v1745, %v1939
      %v1956 = vsub.f32 %v1750, %v1940
      %v1957 = vsub.f32 %v1755, %v1941
      %v1958 = vsub.f32 %v1760, %v1942
      %v1959 = vsub.f32 %v1765, %v1943
      %v1960 = vsub.f32 %v1770, %v1944
      %v1961 = vsub.f32 %v1775, %v1945
      %v1962 = vsub.f32 %v1780, %v1946
      %v1963 = vsub.f32 %v1785, %v1947
      %1964 = vst [vmem:[%s217] sm:$0xff] %v1948
      %1965 = vst [vmem:[%s217 + $0x8] sm:$0xff] %v1949
      %1966 = vst [vmem:[%s217 + $0x10] sm:$0xff] %v1950
      %1967 = vst [vmem:[%s217 + $0x18] sm:$0xff] %v1951
      %1968 = vst [vmem:[%s217 + $0x20] sm:$0xff] %v1952
      %1969 = vst [vmem:[%s217 + $0x28] sm:$0xff] %v1953
      %1970 = vst [vmem:[%s217 + $0x30] sm:$0xff] %v1954
      %1971 = vst [vmem:[%s217 + $0x38] sm:$0xff] %v1955
      %1972 = vst [vmem:[%s217 + $0x40] sm:$0xff] %v1956
      %1973 = vst [vmem:[%s217 + $0x48] sm:$0xff] %v1957
      %1974 = vst [vmem:[%s217 + $0x50] sm:$0xff] %v1958
      %1975 = vst [vmem:[%s217 + $0x58] sm:$0xff] %v1959
      %1976 = vst [vmem:[%s217 + $0x60] sm:$0xff] %v1960
      %1977 = vst [vmem:[%s217 + $0x68] sm:$0xff] %v1961
      %1978 = vst [vmem:[%s217 + $0x70] sm:$0xff] %v1962
      %1979 = vst [vmem:[%s217 + $0x78] sm:$0xff] %v1963
      %p1980 = scmp.lt.s32.totalorder %s15, 1
      %s1981 = scalar_select %p1980, %s15, 1
      %s1982 = smul.addr %s1981, 16
      %s1983 = smul.addr %s1982, 8
      %s1984 = scalar_lea.vmem %s4, %s1983
      // Predicated region
      $region37: #{gnn_forward.1} parent=35 // pred_check
        %p1985 = pneg %p127
      $region38: #{gnn_forward.1} parent=35 // pred_check_branch
        %1987 = sbr.rel (%p1985) target = $region40
      $region39: #{gnn_forward.1} parent=35 // pred_region
        _
      $region40: #{gnn_forward.1} parent=35 // pred_fallthru
        _
    $region36: #{gnn_forward.1} parent=5 // pred_fallthru
      _
    %p1988 = scmp.le.s32.totalorder 2, %s10
    // Predicated region
    $region41: #{gnn_forward.1} parent=5 // pred_check
      %p1989 = pneg %p1988
    $region42: #{gnn_forward.1} parent=5 // pred_check_branch
      %1991 = sbr.rel (%p1989) target = $region44
    $region43: #{gnn_forward.1} parent=5 // pred_region
      %s1992 = ssub.s32 %s10, 2
      // Predicated region
      $region45: #{gnn_forward.1} parent=43 // pred_check
        %p1993 = pneg %p133
      $region46: #{gnn_forward.1} parent=43 // pred_check_branch
        %1995 = sbr.rel (%p1993) target = $region48
      $region47: #{gnn_forward.1} parent=43 // pred_region
        %p1996 = scmp.lt.s32.totalorder %s16, 1
        %s1997 = scalar_select %p1996, %s16, 1
        %s1998 = smul.addr %s1997, 16
        %s1999 = smul.addr %s1998, 8
        %s2000 = scalar_lea.vmem %s4, %s1999
      $region48: #{gnn_forward.1} parent=43 // pred_fallthru
        _
    $region44: #{gnn_forward.1} parent=5 // pred_fallthru
      _
  $region6: #{gnn_forward.1} parent=0 // loop_footer
    %s14 = sadd.s32 1, %s10
  $region7: #{gnn_forward.1} parent=0 // loop_footer_branch
    %9 = sbr.rel target = $region3
  $region8: #{gnn_forward.1} parent=0 // loop_exit
    _

</llo_original>
